<compile_context>
chip_gen: v6e
topology: v6e:2x2x1
jax: 0.10.0
libtpu: 0.0.40
codegen_flags: <defaults>
</compile_context>

<pallas_src>
import jax
import jax.numpy as jnp
from jax.experimental import pallas as pl
from jax.experimental.pallas import tpu as pltpu

LANES = 128  # vreg lane width; padded output width (real logits in cols [:3])


def gate_kernel(x_ref,      # VMEM (B, KP)       [s | s_l | s_r | tar_flat | 1 | 0]
                wbig_ref,   # VMEM (KP, 3D)      fused W^T / kron(u, I) / biases
                wc_ref,     # VMEM (3D+8, 128)   rows [0:3D]=tile(w4^T,3), row 3D=b4
                out_ref):   # VMEM (B, 128)
    three_d = wbig_ref.shape[1]
    x = x_ref[...]                                              # read once

    # One MXU matmul = 3x Linear(D,D) + 3x Linear(L,1) over tar + both biases.
    z = jnp.dot(x, wbig_ref[...], preferred_element_type=jnp.float32)   # (B, 3D)

    # F.softmax(cat([z, z_l, z_r], 1), dim=0): independent per column over batch.
    m = jnp.max(z, axis=0, keepdims=True)
    e = jnp.exp(z - m)
    g = e / jnp.sum(e, axis=0, keepdims=True)                   # exact reciprocal

    # Gated mixture; the sum over the three gate blocks is folded into the
    # classifier weight (w4^T tiled 3x along K), so the only lane slice is
    # offset-0: no intra-vreg rotates, no in-kernel concatenates.
    gx = g * x[:, :three_d]                                     # (B, 3D)

    w4t = wc_ref[:three_d, :]                                   # (3D, 128)
    b4r = wc_ref[three_d:three_d + 1, :]                        # (1, 128)
    logits = jnp.dot(gx, w4t, preferred_element_type=jnp.float32) + b4r

    # Final F.softmax(..., dim=0); lane-dense padded store.
    m2 = jnp.max(logits, axis=0, keepdims=True)
    e2 = jnp.exp(logits - m2)
    out_ref[...] = e2 / jnp.sum(e2, axis=0, keepdims=True)


def make_gate_params(ww, wb, uw, ub, w4, b4):
    """One-time constant prep (hoisted out of the per-call path)."""
    _, D, _ = ww.shape                       # ww: (3, D, D)
    L = uw.shape[1]                          # uw: (3, L)
    three_d = 3 * D
    used = three_d + L * D + 1               # +1: ones lane carrying the biases
    kp = pl.cdiv(used, LANES) * LANES        # lane-align the fused K axis

    w_big = jnp.zeros((kp, three_d), jnp.float32)
    eye = jnp.eye(D, dtype=jnp.float32)
    for k in range(3):
        # z_k = s_k @ ww[k]^T                  (PyTorch nn.Linear convention)
        w_big = w_big.at[k * D:(k + 1) * D, k * D:(k + 1) * D].set(ww[k].T)
        # h_k[:, d] = sum_l uw[k, l] * tar[:, l, d]   (nn.Linear(L, 1) over tar)
        w_big = w_big.at[three_d:three_d + L * D, k * D:(k + 1) * D].set(
            jnp.kron(uw[k][:, None], eye))
        # wb_k + ub_k ride the ones lane of x.
        w_big = w_big.at[three_d + L * D, k * D:(k + 1) * D].set(wb[k] + ub[k, 0])

    # Classifier with the gate-sum folded in: ss @ w4^T == (g*x_cat) @ tile(w4^T, 3)
    wc = jnp.zeros((three_d + 8, LANES), jnp.float32)
    wc = wc.at[:three_d, :3].set(jnp.tile(w4.T, (3, 1)))
    wc = wc.at[three_d, :3].set(b4)
    return w_big, wc


def contextualized_gate(s, s_l, s_r, tar, w_big, wc):
    """Per-call path: assemble the single activation operand + one pallas_call."""
    B, D = s.shape
    L = tar.shape[1]
    kp = w_big.shape[0]
    used = 3 * D + L * D + 1
    x = jnp.concatenate(
        [s, s_l, s_r, tar.reshape(B, L * D),
         jnp.ones((B, 1), s.dtype), jnp.zeros((B, kp - used), s.dtype)], axis=1)

    vmem = pl.BlockSpec(memory_space=pltpu.MemorySpace.VMEM)
    out_padded = pl.pallas_call(
        gate_kernel,
        out_shape=jax.ShapeDtypeStruct((B, LANES), jnp.float32),
        in_specs=[vmem, vmem, vmem],
        out_specs=vmem,
    )(x, w_big, wc)
    return out_padded[:, :3]


def reference(s, s_l, s_r, tar, ww, wb, uw, ub, w4, b4):
    """Pure-JAX replica of the PyTorch forward (gate part) for verification."""
    def linear(x, k):
        hh = jnp.einsum("bld,l->bd", tar, uw[k]) + ub[k, 0]
        return x @ ww[k].T + wb[k] + hh

    z = linear(s, 0)
    z_l = linear(s_l, 1)
    z_r = linear(s_r, 2)
    z_cat = jnp.concatenate([z, z_l, z_r], axis=1)
    z_cat = jax.nn.softmax(z_cat, axis=0)
    D = s.shape[1]
    zz = (z_cat[:, :D], z_cat[:, D:2 * D], z_cat[:, 2 * D:])
    ss = zz[0] * s + zz[1] * s_l + zz[2] * s_r
    return jax.nn.softmax(ss @ w4.T + b4, axis=0)


if __name__ == "__main__":
    jax.config.update("jax_default_matmul_precision", "highest")

    B, L, D = 2, 8, 32        # batch, max_length, embed_dim
    keys = jax.random.split(jax.random.PRNGKey(0), 18)

    # Synthesized sub-module outputs (see TODO(synk) above).
    s = jax.random.normal(keys[0], (B, D), jnp.float32)
    s_l = jax.random.normal(keys[1], (B, D), jnp.float32)
    s_r = jax.random.normal(keys[2], (B, D), jnp.float32)
    tar = jax.random.normal(keys[3], (B, L, D), jnp.float32)

    def xavier(k, out_f, in_f):
        bound = (6.0 / (in_f + out_f)) ** 0.5
        return jax.random.uniform(k, (out_f, in_f), jnp.float32, -bound, bound)

    def bias_init(k, out_f, in_f):
        bound = 1.0 / (in_f ** 0.5)
        return jax.random.uniform(k, (out_f,), jnp.float32, -bound, bound)

    # Three nn.Linear(D, D) + nn.Linear(L, 1) pairs (one per linear() branch).
    ww = jnp.stack([xavier(keys[4 + i], D, D) for i in range(3)])          # (3, D, D)
    wb = jnp.stack([bias_init(keys[7 + i], D, D) for i in range(3)])       # (3, D)
    uw = jnp.stack([xavier(keys[10 + i], 1, L)[0] for i in range(3)])      # (3, L)
    ub = jnp.stack([bias_init(keys[13 + i], 1, L) for i in range(3)])      # (3, 1)
    w4 = xavier(keys[16], 3, D)                                            # (3, D)
    b4 = bias_init(keys[17], 3, D)                                         # (3,)

    # One-time constant prep, closed over by the (jitted) per-call path.
    w_big, wc = make_gate_params(ww, wb, uw, ub, w4, b4)
    gate = jax.jit(contextualized_gate)

    logit = gate(s, s_l, s_r, tar, w_big, wc)
    logit = jax.block_until_ready(logit)

    ref = reference(s, s_l, s_r, tar, ww, wb, uw, ub, w4, b4)
    assert logit.shape == (B, 3)
    assert jnp.allclose(logit, ref, atol=1e-4, rtol=1e-4)

    print("KERNEL_OK")
</pallas_src>

<mosaic_0001>
module attributes {stable_mosaic.version = 11 : i64} {
  func.func @gate_kernel(%arg0: memref<2x384xf32, #tpu.memory_space<vmem>>, %arg1: memref<384x96xf32, #tpu.memory_space<vmem>>, %arg2: memref<104x128xf32, #tpu.memory_space<vmem>>, %arg3: memref<2x128xf32, #tpu.memory_space<vmem>>) attributes {dimension_semantics = [], scalar_prefetch = 0 : i64, scratch_operands = 0 : i64, tpu.core_type = #tpu.core_type<tc>} {
    %c0 = arith.constant 0 : index
    %c0_0 = arith.constant 0 : index
    %0 = vector.load %arg0[%c0, %c0_0] : memref<2x384xf32, #tpu.memory_space<vmem>>, vector<2x384xf32>
    %c0_1 = arith.constant 0 : index
    %c0_2 = arith.constant 0 : index
    %1 = vector.load %arg1[%c0_1, %c0_2] : memref<384x96xf32, #tpu.memory_space<vmem>>, vector<384x96xf32>
    %cst = arith.constant dense<0.000000e+00> : vector<2x96xf32>
    %2 = tpu.matmul %0, %1, %cst {dimension_numbers = #tpu.dot_dimension_numbers<[1], [0], [0], [1], [0, 0, 1, 1], [], []>, precision = #tpu.contract_precision<fp32>} : vector<2x384xf32>, vector<384x96xf32>, vector<2x96xf32> -> vector<2x96xf32>
    %cst_3 = arith.constant dense<0xFF800000> : vector<96xf32>
    %3 = vector.multi_reduction <maximumf>, %2, %cst_3 [0] : vector<2x96xf32> to vector<96xf32>
    %4 = vector.shape_cast %3 : vector<96xf32> to vector<1x96xf32>
    %5 = vector.broadcast %4 : vector<1x96xf32> to vector<2x96xf32>
    %6 = arith.subf %2, %5 : vector<2x96xf32>
    %7 = math.exp %6 : vector<2x96xf32>
    %cst_4 = arith.constant dense<0.000000e+00> : vector<96xf32>
    %8 = vector.multi_reduction <add>, %7, %cst_4 [0] : vector<2x96xf32> to vector<96xf32>
    %9 = vector.shape_cast %8 : vector<96xf32> to vector<1x96xf32>
    %10 = vector.broadcast %9 : vector<1x96xf32> to vector<2x96xf32>
    %11 = arith.divf %7, %10 : vector<2x96xf32>
    %12 = vector.extract_strided_slice %0 {offsets = [0, 0], sizes = [2, 96], strides = [1, 1]} : vector<2x384xf32> to vector<2x96xf32>
    %13 = arith.mulf %11, %12 : vector<2x96xf32>
    %c0_5 = arith.constant 0 : index
    %c0_6 = arith.constant 0 : index
    %14 = vector.load %arg2[%c0_5, %c0_6] : memref<104x128xf32, #tpu.memory_space<vmem>>, vector<96x128xf32>
    %c96 = arith.constant 96 : index
    %c0_7 = arith.constant 0 : index
    %15 = vector.load %arg2[%c96, %c0_7] : memref<104x128xf32, #tpu.memory_space<vmem>>, vector<1x128xf32>
    %cst_8 = arith.constant dense<0.000000e+00> : vector<2x128xf32>
    %16 = tpu.matmul %13, %14, %cst_8 {dimension_numbers = #tpu.dot_dimension_numbers<[1], [0], [0], [1], [0, 0, 1, 1], [], []>, precision = #tpu.contract_precision<fp32>} : vector<2x96xf32>, vector<96x128xf32>, vector<2x128xf32> -> vector<2x128xf32>
    %17 = vector.broadcast %15 : vector<1x128xf32> to vector<2x128xf32>
    %18 = arith.addf %16, %17 : vector<2x128xf32>
    %cst_9 = arith.constant dense<0xFF800000> : vector<128xf32>
    %19 = vector.multi_reduction <maximumf>, %18, %cst_9 [0] : vector<2x128xf32> to vector<128xf32>
    %20 = vector.shape_cast %19 : vector<128xf32> to vector<1x128xf32>
    %21 = vector.broadcast %20 : vector<1x128xf32> to vector<2x128xf32>
    %22 = arith.subf %18, %21 : vector<2x128xf32>
    %23 = math.exp %22 : vector<2x128xf32>
    %cst_10 = arith.constant dense<0.000000e+00> : vector<128xf32>
    %24 = vector.multi_reduction <add>, %23, %cst_10 [0] : vector<2x128xf32> to vector<128xf32>
    %25 = vector.shape_cast %24 : vector<128xf32> to vector<1x128xf32>
    %26 = vector.broadcast %25 : vector<1x128xf32> to vector<2x128xf32>
    %27 = arith.divf %23, %26 : vector<2x128xf32>
    %c0_11 = arith.constant 0 : index
    %c0_12 = arith.constant 0 : index
    %28 = vector.load %arg3[%c0_11, %c0_12] : memref<2x128xf32, #tpu.memory_space<vmem>>, vector<2x128xf32>
    tpu.vector_store %arg3[%c0_11, %c0_12], %27 {strides = array<i32>} : memref<2x128xf32, #tpu.memory_space<vmem>>, vector<2x128xf32>,
    return
  }
}

</mosaic_0001>

<llo_original>
// kernel: contextualized_gate.1
$region0: #{contextualized_gate.1}
  #allocation0 [shape = 'u32[]', space=smem, size = 0x4, offset = 0x4, fixed_abs, tag = 'smem constant byte address 0x4 - core index']
  #allocation1 [shape = 'u32[144,128]{1,0:T(1,128)}', space=vmem, size = 0x12000, scoped, tag = 'internal scratch']
  %s0 = inlined_call_operand.vmem [shape: f32[2,384], index: 0, kind: input, shape index: {}]
  %s1 = inlined_call_operand.vmem [shape: f32[384,96], index: 1, kind: input, shape index: {}]
  %s2 = inlined_call_operand.vmem [shape: f32[104,128], index: 2, kind: input, shape index: {}]
  %s3 = inlined_call_operand.hbm [shape: f32[2,128], index: 3, kind: output, shape index: {}]
  %s4 = sld [smem:[#allocation0]]
  $region22: #{contextualized_gate.1} parent=0
    _
  %s6 = ssub.s32 1, %s4
  %s7 = scalar_select 0, %s6, %s4
  $region1: #{contextualized_gate.1} parent=0
    #allocation2 [shape = 'u8[1024]{0}', space=vmem, size = 0x400, scoped, tag = 'output window, operand 0, single buffered']
    #allocation3 [shape = 's32[1]{0}', space=sflag, size = 0x4, scoped, tag = 'scoped memory for contextualized_gate.1']
    %8 = vsyncpa [#allocation3], 0
    // Predicated region
    $region2: #{contextualized_gate.1} parent=1 // pred_check
      _
    $region3: #{contextualized_gate.1} parent=1 // pred_check_branch
      %10 = sbr.rel (0) target = $region5
    $region4: #{contextualized_gate.1} parent=1 // pred_region
      _
    $region5: #{contextualized_gate.1} parent=1 // pred_fallthru
      _
    // Predicated region
    $region6: #{contextualized_gate.1} parent=1 // pred_check
      _
    $region7: #{contextualized_gate.1} parent=1 // pred_check_branch
      %12 = sbr.rel (0) target = $region9
    $region8: #{contextualized_gate.1} parent=1 // pred_region
      _
    $region9: #{contextualized_gate.1} parent=1 // pred_fallthru
      _
    // Predicated region
    $region10: #{contextualized_gate.1} parent=1 // pred_check
      _
    $region11: #{contextualized_gate.1} parent=1 // pred_check_branch
      %14 = sbr.rel (0) target = $region13
    $region12: #{contextualized_gate.1} parent=1 // pred_region
      _
    $region13: #{contextualized_gate.1} parent=1 // pred_fallthru
      _
    %v15 = vld [vmem:[%s0] sm:$0x3f]
    %v16 = vld [vmem:[%s1] sm:$0xff]
    %v17 = vld [vmem:[%s1 + $0x8] sm:$0xff]
    %v18 = vld [vmem:[%s1 + $0x10] sm:$0xff]
    %v19 = vld [vmem:[%s1 + $0x18] sm:$0xff]
    %v20 = vld [vmem:[%s1 + $0x20] sm:$0xff]
    %v21 = vld [vmem:[%s1 + $0x28] sm:$0xff]
    %v22 = vld [vmem:[%s1 + $0x30] sm:$0xff]
    %v23 = vld [vmem:[%s1 + $0x38] sm:$0xff]
    %v24 = vld [vmem:[%s1 + $0x40] sm:$0xff]
    %v25 = vld [vmem:[%s1 + $0x48] sm:$0xff]
    %v26 = vld [vmem:[%s1 + $0x50] sm:$0xff]
    %v27 = vld [vmem:[%s1 + $0x58] sm:$0xff]
    %v28 = vld [vmem:[%s1 + $0x60] sm:$0xff]
    %v29 = vld [vmem:[%s1 + $0x68] sm:$0xff]
    %v30 = vld [vmem:[%s1 + $0x70] sm:$0xff]
    %v31 = vld [vmem:[%s1 + $0x78] sm:$0xff]
    %v32 = vld [vmem:[%s1 + $0x80] sm:$0xff]
    %v33 = vld [vmem:[%s1 + $0x88] sm:$0xff]
    %v34 = vld [vmem:[%s1 + $0x90] sm:$0xff]
    %v35 = vld [vmem:[%s1 + $0x98] sm:$0xff]
    %v36 = vld [vmem:[%s1 + $0xa0] sm:$0xff]
    %v37 = vld [vmem:[%s1 + $0xa8] sm:$0xff]
    %v38 = vld [vmem:[%s1 + $0xb0] sm:$0xff]
    %v39 = vld [vmem:[%s1 + $0xb8] sm:$0xff]
    %v40 = vld [vmem:[%s1 + $0xc0] sm:$0xff]
    %v41 = vld [vmem:[%s1 + $0xc8] sm:$0xff]
    %v42 = vld [vmem:[%s1 + $0xd0] sm:$0xff]
    %v43 = vld [vmem:[%s1 + $0xd8] sm:$0xff]
    %v44 = vld [vmem:[%s1 + $0xe0] sm:$0xff]
    %v45 = vld [vmem:[%s1 + $0xe8] sm:$0xff]
    %v46 = vld [vmem:[%s1 + $0xf0] sm:$0xff]
    %v47 = vld [vmem:[%s1 + $0xf8] sm:$0xff]
    %v48 = vld [vmem:[%s1 + $0x100] sm:$0xff]
    %v49 = vld [vmem:[%s1 + $0x108] sm:$0xff]
    %v50 = vld [vmem:[%s1 + $0x110] sm:$0xff]
    %v51 = vld [vmem:[%s1 + $0x118] sm:$0xff]
    %v52 = vld [vmem:[%s1 + $0x120] sm:$0xff]
    %v53 = vld [vmem:[%s1 + $0x128] sm:$0xff]
    %v54 = vld [vmem:[%s1 + $0x130] sm:$0xff]
    %v55 = vld [vmem:[%s1 + $0x138] sm:$0xff]
    %v56 = vld [vmem:[%s1 + $0x140] sm:$0xff]
    %v57 = vld [vmem:[%s1 + $0x148] sm:$0xff]
    %v58 = vld [vmem:[%s1 + $0x150] sm:$0xff]
    %v59 = vld [vmem:[%s1 + $0x158] sm:$0xff]
    %v60 = vld [vmem:[%s1 + $0x160] sm:$0xff]
    %v61 = vld [vmem:[%s1 + $0x168] sm:$0xff]
    %v62 = vld [vmem:[%s1 + $0x170] sm:$0xff]
    %v63 = vld [vmem:[%s1 + $0x178] sm:$0xff]
    %v65 = vcombine.high %v15, %v15
    %v67 = vunpack.c.l.s4 1983009808
    %v68 = vunpack.c.0.s8 %v67
    %v69 = vlaneseq
    %v70 = vshrl.u32 %v69, 7
    %v71 = vsub.s32 %v68, %v70
    %v72 = vrot.slane %v15, %v71
    %v74 = vunpack.c.l.s4 1983009808
    %v75 = vunpack.c.0.s8 %v74
    %v76 = vlaneseq
    %v77 = vshrl.u32 %v76, 7
    %v78 = vsub.s32 %v75, %v77
    %v79 = vrot.slane %v65, %v78
    %v80 = vcombine.high %v72, %v72
    %84 = vmatprep.subr.mxu0 0.0
    %v85 = vand.u32 %v31, 4294901760
    %86 = vmatpush1.msra.mxu0 %v85
    %87 = vmatprep.subr.mxu0 0.0
    %v88 = vand.u32 %v30, 4294901760
    %89 = vmatpush1.msra.mxu0 %v88
    %90 = vmatprep.subr.mxu0 0.0
    %v91 = vand.u32 %v29, 4294901760
    %92 = vmatpush1.msra.mxu0 %v91
    %93 = vmatprep.subr.mxu0 0.0
    %v94 = vand.u32 %v28, 4294901760
    %95 = vmatpush1.msra.mxu0 %v94
    %96 = vmatprep.subr.mxu0 0.0
    %v97 = vand.u32 %v27, 4294901760
    %98 = vmatpush1.msra.mxu0 %v97
    %99 = vmatprep.subr.mxu0 0.0
    %v100 = vand.u32 %v26, 4294901760
    %101 = vmatpush1.msra.mxu0 %v100
    %102 = vmatprep.subr.mxu0 0.0
    %v103 = vand.u32 %v25, 4294901760
    %104 = vmatpush1.msra.mxu0 %v103
    %105 = vmatprep.subr.mxu0 0.0
    %v106 = vand.u32 %v24, 4294901760
    %107 = vmatpush1.msra.mxu0 %v106
    %108 = vmatprep.subr.mxu0 0.0
    %v109 = vand.u32 %v23, 4294901760
    %110 = vmatpush1.msra.mxu0 %v109
    %111 = vmatprep.subr.mxu0 0.0
    %v112 = vand.u32 %v22, 4294901760
    %113 = vmatpush1.msra.mxu0 %v112
    %114 = vmatprep.subr.mxu0 0.0
    %v115 = vand.u32 %v21, 4294901760
    %116 = vmatpush1.msra.mxu0 %v115
    %117 = vmatprep.subr.mxu0 0.0
    %v118 = vand.u32 %v20, 4294901760
    %119 = vmatpush1.msra.mxu0 %v118
    %120 = vmatprep.subr.mxu0 0.0
    %v121 = vand.u32 %v19, 4294901760
    %122 = vmatpush1.msra.mxu0 %v121
    %123 = vmatprep.subr.mxu0 0.0
    %v124 = vand.u32 %v18, 4294901760
    %125 = vmatpush1.msra.mxu0 %v124
    %126 = vmatprep.subr.mxu0 0.0
    %v127 = vand.u32 %v17, 4294901760
    %128 = vmatpush1.msra.mxu0 %v127
    %129 = vmatprep.subr.mxu0 0.0
    %v130 = vand.u32 %v16, 4294901760
    %131 = vmatpush1.msra.mxu0 %v130
    %132 = vmatprep.subr.mxu0 0.0
    %v133 = vand.u32 %v47, 4294901760
    %134 = vmatpush2.msra.mxu0 %v133
    %135 = vmatprep.subr.mxu0 0.0
    %v136 = vand.u32 %v46, 4294901760
    %137 = vmatpush2.msra.mxu0 %v136
    %138 = vmatprep.subr.mxu0 0.0
    %v139 = vand.u32 %v45, 4294901760
    %140 = vmatpush2.msra.mxu0 %v139
    %141 = vmatprep.subr.mxu0 0.0
    %v142 = vand.u32 %v44, 4294901760
    %143 = vmatpush2.msra.mxu0 %v142
    %144 = vmatprep.subr.mxu0 0.0
    %v145 = vand.u32 %v43, 4294901760
    %146 = vmatpush2.msra.mxu0 %v145
    %147 = vmatprep.subr.mxu0 0.0
    %v148 = vand.u32 %v42, 4294901760
    %149 = vmatpush2.msra.mxu0 %v148
    %150 = vmatprep.subr.mxu0 0.0
    %v151 = vand.u32 %v41, 4294901760
    %152 = vmatpush2.msra.mxu0 %v151
    %153 = vmatprep.subr.mxu0 0.0
    %v154 = vand.u32 %v40, 4294901760
    %155 = vmatpush2.msra.mxu0 %v154
    %156 = vmatprep.subr.mxu0 0.0
    %v157 = vand.u32 %v39, 4294901760
    %158 = vmatpush2.msra.mxu0 %v157
    %159 = vmatprep.subr.mxu0 0.0
    %v160 = vand.u32 %v38, 4294901760
    %161 = vmatpush2.msra.mxu0 %v160
    %162 = vmatprep.subr.mxu0 0.0
    %v163 = vand.u32 %v37, 4294901760
    %164 = vmatpush2.msra.mxu0 %v163
    %165 = vmatprep.subr.mxu0 0.0
    %v166 = vand.u32 %v36, 4294901760
    %167 = vmatpush2.msra.mxu0 %v166
    %168 = vmatprep.subr.mxu0 0.0
    %v169 = vand.u32 %v35, 4294901760
    %170 = vmatpush2.msra.mxu0 %v169
    %171 = vmatprep.subr.mxu0 0.0
    %v172 = vand.u32 %v34, 4294901760
    %173 = vmatpush2.msra.mxu0 %v172
    %174 = vmatprep.subr.mxu0 0.0
    %v175 = vand.u32 %v33, 4294901760
    %176 = vmatpush2.msra.mxu0 %v175
    %177 = vmatprep.subr.mxu0 0.0
    %v178 = vand.u32 %v32, 4294901760
    %179 = vmatpush2.msra.mxu0 %v178
    %v180 = vand.u32 %v80, 4294901760
    %v181 = vsub.f32 %v80, %v180
    %v182 = vand.u32 %v181, 4294901760
    %v183 = vsub.f32 %v181, %v182
    %v184 = vand.u32 %v183, 4294901760
    %185 = vmatprep.mubr.f32.mxu0 %v184
    %v186 = vand.u32 %v72, 4294901760
    %v187 = vsub.f32 %v72, %v186
    %v188 = vand.u32 %v187, 4294901760
    %v189 = vsub.f32 %v187, %v188
    %v190 = vand.u32 %v189, 4294901760
    %191 = vmatmul.mubr.f32.gmra.mxu0 %v190
    %v192 = vpop.f32.mrf.mxu0
    %v193 = vadd.f32 0.0, %v192
    %v194 = vpop.f32.mrf.mxu0
    %195 = vdwg.mxu0
    %196 = vmatprep.subr.mxu0 0.0
    %v197 = vand.u32 %v31, 4294901760
    %v198 = vsub.f32 %v31, %v197
    %v199 = vand.u32 %v198, 4294901760
    %v200 = vsub.f32 %v198, %v199
    %v201 = vand.u32 %v200, 4294901760
    %202 = vmatpush1.msra.mxu0 %v201
    %203 = vmatprep.subr.mxu0 0.0
    %v204 = vand.u32 %v30, 4294901760
    %v205 = vsub.f32 %v30, %v204
    %v206 = vand.u32 %v205, 4294901760
    %v207 = vsub.f32 %v205, %v206
    %v208 = vand.u32 %v207, 4294901760
    %209 = vmatpush1.msra.mxu0 %v208
    %210 = vmatprep.subr.mxu0 0.0
    %v211 = vand.u32 %v29, 4294901760
    %v212 = vsub.f32 %v29, %v211
    %v213 = vand.u32 %v212, 4294901760
    %v214 = vsub.f32 %v212, %v213
    %v215 = vand.u32 %v214, 4294901760
    %216 = vmatpush1.msra.mxu0 %v215
    %217 = vmatprep.subr.mxu0 0.0
    %v218 = vand.u32 %v28, 4294901760
    %v219 = vsub.f32 %v28, %v218
    %v220 = vand.u32 %v219, 4294901760
    %v221 = vsub.f32 %v219, %v220
    %v222 = vand.u32 %v221, 4294901760
    %223 = vmatpush1.msra.mxu0 %v222
    %224 = vmatprep.subr.mxu0 0.0
    %v225 = vand.u32 %v27, 4294901760
    %v226 = vsub.f32 %v27, %v225
    %v227 = vand.u32 %v226, 4294901760
    %v228 = vsub.f32 %v226, %v227
    %v229 = vand.u32 %v228, 4294901760
    %230 = vmatpush1.msra.mxu0 %v229
    %231 = vmatprep.subr.mxu0 0.0
    %v232 = vand.u32 %v26, 4294901760
    %v233 = vsub.f32 %v26, %v232
    %v234 = vand.u32 %v233, 4294901760
    %v235 = vsub.f32 %v233, %v234
    %v236 = vand.u32 %v235, 4294901760
    %237 = vmatpush1.msra.mxu0 %v236
    %238 = vmatprep.subr.mxu0 0.0
    %v239 = vand.u32 %v25, 4294901760
    %v240 = vsub.f32 %v25, %v239
    %v241 = vand.u32 %v240, 4294901760
    %v242 = vsub.f32 %v240, %v241
    %v243 = vand.u32 %v242, 4294901760
    %244 = vmatpush1.msra.mxu0 %v243
    %245 = vmatprep.subr.mxu0 0.0
    %v246 = vand.u32 %v24, 4294901760
    %v247 = vsub.f32 %v24, %v246
    %v248 = vand.u32 %v247, 4294901760
    %v249 = vsub.f32 %v247, %v248
    %v250 = vand.u32 %v249, 4294901760
    %251 = vmatpush1.msra.mxu0 %v250
    %252 = vmatprep.subr.mxu0 0.0
    %v253 = vand.u32 %v23, 4294901760
    %v254 = vsub.f32 %v23, %v253
    %v255 = vand.u32 %v254, 4294901760
    %v256 = vsub.f32 %v254, %v255
    %v257 = vand.u32 %v256, 4294901760
    %258 = vmatpush1.msra.mxu0 %v257
    %259 = vmatprep.subr.mxu0 0.0
    %v260 = vand.u32 %v22, 4294901760
    %v261 = vsub.f32 %v22, %v260
    %v262 = vand.u32 %v261, 4294901760
    %v263 = vsub.f32 %v261, %v262
    %v264 = vand.u32 %v263, 4294901760
    %265 = vmatpush1.msra.mxu0 %v264
    %266 = vmatprep.subr.mxu0 0.0
    %v267 = vand.u32 %v21, 4294901760
    %v268 = vsub.f32 %v21, %v267
    %v269 = vand.u32 %v268, 4294901760
    %v270 = vsub.f32 %v268, %v269
    %v271 = vand.u32 %v270, 4294901760
    %272 = vmatpush1.msra.mxu0 %v271
    %273 = vmatprep.subr.mxu0 0.0
    %v274 = vand.u32 %v20, 4294901760
    %v275 = vsub.f32 %v20, %v274
    %v276 = vand.u32 %v275, 4294901760
    %v277 = vsub.f32 %v275, %v276
    %v278 = vand.u32 %v277, 4294901760
    %279 = vmatpush1.msra.mxu0 %v278
    %280 = vmatprep.subr.mxu0 0.0
    %v281 = vand.u32 %v19, 4294901760
    %v282 = vsub.f32 %v19, %v281
    %v283 = vand.u32 %v282, 4294901760
    %v284 = vsub.f32 %v282, %v283
    %v285 = vand.u32 %v284, 4294901760
    %286 = vmatpush1.msra.mxu0 %v285
    %287 = vmatprep.subr.mxu0 0.0
    %v288 = vand.u32 %v18, 4294901760
    %v289 = vsub.f32 %v18, %v288
    %v290 = vand.u32 %v289, 4294901760
    %v291 = vsub.f32 %v289, %v290
    %v292 = vand.u32 %v291, 4294901760
    %293 = vmatpush1.msra.mxu0 %v292
    %294 = vmatprep.subr.mxu0 0.0
    %v295 = vand.u32 %v17, 4294901760
    %v296 = vsub.f32 %v17, %v295
    %v297 = vand.u32 %v296, 4294901760
    %v298 = vsub.f32 %v296, %v297
    %v299 = vand.u32 %v298, 4294901760
    %300 = vmatpush1.msra.mxu0 %v299
    %301 = vmatprep.subr.mxu0 0.0
    %v302 = vand.u32 %v16, 4294901760
    %v303 = vsub.f32 %v16, %v302
    %v304 = vand.u32 %v303, 4294901760
    %v305 = vsub.f32 %v303, %v304
    %v306 = vand.u32 %v305, 4294901760
    %307 = vmatpush1.msra.mxu0 %v306
    %308 = vmatprep.subr.mxu0 0.0
    %v309 = vand.u32 %v47, 4294901760
    %v310 = vsub.f32 %v47, %v309
    %v311 = vand.u32 %v310, 4294901760
    %v312 = vsub.f32 %v310, %v311
    %v313 = vand.u32 %v312, 4294901760
    %314 = vmatpush2.msra.mxu0 %v313
    %315 = vmatprep.subr.mxu0 0.0
    %v316 = vand.u32 %v46, 4294901760
    %v317 = vsub.f32 %v46, %v316
    %v318 = vand.u32 %v317, 4294901760
    %v319 = vsub.f32 %v317, %v318
    %v320 = vand.u32 %v319, 4294901760
    %321 = vmatpush2.msra.mxu0 %v320
    %322 = vmatprep.subr.mxu0 0.0
    %v323 = vand.u32 %v45, 4294901760
    %v324 = vsub.f32 %v45, %v323
    %v325 = vand.u32 %v324, 4294901760
    %v326 = vsub.f32 %v324, %v325
    %v327 = vand.u32 %v326, 4294901760
    %328 = vmatpush2.msra.mxu0 %v327
    %329 = vmatprep.subr.mxu0 0.0
    %v330 = vand.u32 %v44, 4294901760
    %v331 = vsub.f32 %v44, %v330
    %v332 = vand.u32 %v331, 4294901760
    %v333 = vsub.f32 %v331, %v332
    %v334 = vand.u32 %v333, 4294901760
    %335 = vmatpush2.msra.mxu0 %v334
    %336 = vmatprep.subr.mxu0 0.0
    %v337 = vand.u32 %v43, 4294901760
    %v338 = vsub.f32 %v43, %v337
    %v339 = vand.u32 %v338, 4294901760
    %v340 = vsub.f32 %v338, %v339
    %v341 = vand.u32 %v340, 4294901760
    %342 = vmatpush2.msra.mxu0 %v341
    %343 = vmatprep.subr.mxu0 0.0
    %v344 = vand.u32 %v42, 4294901760
    %v345 = vsub.f32 %v42, %v344
    %v346 = vand.u32 %v345, 4294901760
    %v347 = vsub.f32 %v345, %v346
    %v348 = vand.u32 %v347, 4294901760
    %349 = vmatpush2.msra.mxu0 %v348
    %350 = vmatprep.subr.mxu0 0.0
    %v351 = vand.u32 %v41, 4294901760
    %v352 = vsub.f32 %v41, %v351
    %v353 = vand.u32 %v352, 4294901760
    %v354 = vsub.f32 %v352, %v353
    %v355 = vand.u32 %v354, 4294901760
    %356 = vmatpush2.msra.mxu0 %v355
    %357 = vmatprep.subr.mxu0 0.0
    %v358 = vand.u32 %v40, 4294901760
    %v359 = vsub.f32 %v40, %v358
    %v360 = vand.u32 %v359, 4294901760
    %v361 = vsub.f32 %v359, %v360
    %v362 = vand.u32 %v361, 4294901760
    %363 = vmatpush2.msra.mxu0 %v362
    %364 = vmatprep.subr.mxu0 0.0
    %v365 = vand.u32 %v39, 4294901760
    %v366 = vsub.f32 %v39, %v365
    %v367 = vand.u32 %v366, 4294901760
    %v368 = vsub.f32 %v366, %v367
    %v369 = vand.u32 %v368, 4294901760
    %370 = vmatpush2.msra.mxu0 %v369
    %371 = vmatprep.subr.mxu0 0.0
    %v372 = vand.u32 %v38, 4294901760
    %v373 = vsub.f32 %v38, %v372
    %v374 = vand.u32 %v373, 4294901760
    %v375 = vsub.f32 %v373, %v374
    %v376 = vand.u32 %v375, 4294901760
    %377 = vmatpush2.msra.mxu0 %v376
    %378 = vmatprep.subr.mxu0 0.0
    %v379 = vand.u32 %v37, 4294901760
    %v380 = vsub.f32 %v37, %v379
    %v381 = vand.u32 %v380, 4294901760
    %v382 = vsub.f32 %v380, %v381
    %v383 = vand.u32 %v382, 4294901760
    %384 = vmatpush2.msra.mxu0 %v383
    %385 = vmatprep.subr.mxu0 0.0
    %v386 = vand.u32 %v36, 4294901760
    %v387 = vsub.f32 %v36, %v386
    %v388 = vand.u32 %v387, 4294901760
    %v389 = vsub.f32 %v387, %v388
    %v390 = vand.u32 %v389, 4294901760
    %391 = vmatpush2.msra.mxu0 %v390
    %392 = vmatprep.subr.mxu0 0.0
    %v393 = vand.u32 %v35, 4294901760
    %v394 = vsub.f32 %v35, %v393
    %v395 = vand.u32 %v394, 4294901760
    %v396 = vsub.f32 %v394, %v395
    %v397 = vand.u32 %v396, 4294901760
    %398 = vmatpush2.msra.mxu0 %v397
    %399 = vmatprep.subr.mxu0 0.0
    %v400 = vand.u32 %v34, 4294901760
    %v401 = vsub.f32 %v34, %v400
    %v402 = vand.u32 %v401, 4294901760
    %v403 = vsub.f32 %v401, %v402
    %v404 = vand.u32 %v403, 4294901760
    %405 = vmatpush2.msra.mxu0 %v404
    %406 = vmatprep.subr.mxu0 0.0
    %v407 = vand.u32 %v33, 4294901760
    %v408 = vsub.f32 %v33, %v407
    %v409 = vand.u32 %v408, 4294901760
    %v410 = vsub.f32 %v408, %v409
    %v411 = vand.u32 %v410, 4294901760
    %412 = vmatpush2.msra.mxu0 %v411
    %413 = vmatprep.subr.mxu0 0.0
    %v414 = vand.u32 %v32, 4294901760
    %v415 = vsub.f32 %v32, %v414
    %v416 = vand.u32 %v415, 4294901760
    %v417 = vsub.f32 %v415, %v416
    %v418 = vand.u32 %v417, 4294901760
    %419 = vmatpush2.msra.mxu0 %v418
    %v420 = vand.u32 %v80, 4294901760
    %421 = vmatprep.mubr.f32.mxu0 %v420
    %v422 = vand.u32 %v72, 4294901760
    %423 = vmatmul.mubr.f32.gmra.mxu0 %v422
    %v424 = vpop.f32.mrf.mxu0
    %v425 = vadd.f32 %v193, %v424
    %v426 = vpop.f32.mrf.mxu0
    %427 = vdwg.mxu0
    %428 = vmatprep.subr.mxu0 0.0
    %v429 = vand.u32 %v31, 4294901760
    %v430 = vsub.f32 %v31, %v429
    %431 = vmatpush1.msra.mxu0 %v430
    %432 = vmatprep.subr.mxu0 0.0
    %v433 = vand.u32 %v30, 4294901760
    %v434 = vsub.f32 %v30, %v433
    %435 = vmatpush1.msra.mxu0 %v434
    %436 = vmatprep.subr.mxu0 0.0
    %v437 = vand.u32 %v29, 4294901760
    %v438 = vsub.f32 %v29, %v437
    %439 = vmatpush1.msra.mxu0 %v438
    %440 = vmatprep.subr.mxu0 0.0
    %v441 = vand.u32 %v28, 4294901760
    %v442 = vsub.f32 %v28, %v441
    %443 = vmatpush1.msra.mxu0 %v442
    %444 = vmatprep.subr.mxu0 0.0
    %v445 = vand.u32 %v27, 4294901760
    %v446 = vsub.f32 %v27, %v445
    %447 = vmatpush1.msra.mxu0 %v446
    %448 = vmatprep.subr.mxu0 0.0
    %v449 = vand.u32 %v26, 4294901760
    %v450 = vsub.f32 %v26, %v449
    %451 = vmatpush1.msra.mxu0 %v450
    %452 = vmatprep.subr.mxu0 0.0
    %v453 = vand.u32 %v25, 4294901760
    %v454 = vsub.f32 %v25, %v453
    %455 = vmatpush1.msra.mxu0 %v454
    %456 = vmatprep.subr.mxu0 0.0
    %v457 = vand.u32 %v24, 4294901760
    %v458 = vsub.f32 %v24, %v457
    %459 = vmatpush1.msra.mxu0 %v458
    %460 = vmatprep.subr.mxu0 0.0
    %v461 = vand.u32 %v23, 4294901760
    %v462 = vsub.f32 %v23, %v461
    %463 = vmatpush1.msra.mxu0 %v462
    %464 = vmatprep.subr.mxu0 0.0
    %v465 = vand.u32 %v22, 4294901760
    %v466 = vsub.f32 %v22, %v465
    %467 = vmatpush1.msra.mxu0 %v466
    %468 = vmatprep.subr.mxu0 0.0
    %v469 = vand.u32 %v21, 4294901760
    %v470 = vsub.f32 %v21, %v469
    %471 = vmatpush1.msra.mxu0 %v470
    %472 = vmatprep.subr.mxu0 0.0
    %v473 = vand.u32 %v20, 4294901760
    %v474 = vsub.f32 %v20, %v473
    %475 = vmatpush1.msra.mxu0 %v474
    %476 = vmatprep.subr.mxu0 0.0
    %v477 = vand.u32 %v19, 4294901760
    %v478 = vsub.f32 %v19, %v477
    %479 = vmatpush1.msra.mxu0 %v478
    %480 = vmatprep.subr.mxu0 0.0
    %v481 = vand.u32 %v18, 4294901760
    %v482 = vsub.f32 %v18, %v481
    %483 = vmatpush1.msra.mxu0 %v482
    %484 = vmatprep.subr.mxu0 0.0
    %v485 = vand.u32 %v17, 4294901760
    %v486 = vsub.f32 %v17, %v485
    %487 = vmatpush1.msra.mxu0 %v486
    %488 = vmatprep.subr.mxu0 0.0
    %v489 = vand.u32 %v16, 4294901760
    %v490 = vsub.f32 %v16, %v489
    %491 = vmatpush1.msra.mxu0 %v490
    %492 = vmatprep.subr.mxu0 0.0
    %v493 = vand.u32 %v47, 4294901760
    %v494 = vsub.f32 %v47, %v493
    %495 = vmatpush2.msra.mxu0 %v494
    %496 = vmatprep.subr.mxu0 0.0
    %v497 = vand.u32 %v46, 4294901760
    %v498 = vsub.f32 %v46, %v497
    %499 = vmatpush2.msra.mxu0 %v498
    %500 = vmatprep.subr.mxu0 0.0
    %v501 = vand.u32 %v45, 4294901760
    %v502 = vsub.f32 %v45, %v501
    %503 = vmatpush2.msra.mxu0 %v502
    %504 = vmatprep.subr.mxu0 0.0
    %v505 = vand.u32 %v44, 4294901760
    %v506 = vsub.f32 %v44, %v505
    %507 = vmatpush2.msra.mxu0 %v506
    %508 = vmatprep.subr.mxu0 0.0
    %v509 = vand.u32 %v43, 4294901760
    %v510 = vsub.f32 %v43, %v509
    %511 = vmatpush2.msra.mxu0 %v510
    %512 = vmatprep.subr.mxu0 0.0
    %v513 = vand.u32 %v42, 4294901760
    %v514 = vsub.f32 %v42, %v513
    %515 = vmatpush2.msra.mxu0 %v514
    %516 = vmatprep.subr.mxu0 0.0
    %v517 = vand.u32 %v41, 4294901760
    %v518 = vsub.f32 %v41, %v517
    %519 = vmatpush2.msra.mxu0 %v518
    %520 = vmatprep.subr.mxu0 0.0
    %v521 = vand.u32 %v40, 4294901760
    %v522 = vsub.f32 %v40, %v521
    %523 = vmatpush2.msra.mxu0 %v522
    %524 = vmatprep.subr.mxu0 0.0
    %v525 = vand.u32 %v39, 4294901760
    %v526 = vsub.f32 %v39, %v525
    %527 = vmatpush2.msra.mxu0 %v526
    %528 = vmatprep.subr.mxu0 0.0
    %v529 = vand.u32 %v38, 4294901760
    %v530 = vsub.f32 %v38, %v529
    %531 = vmatpush2.msra.mxu0 %v530
    %532 = vmatprep.subr.mxu0 0.0
    %v533 = vand.u32 %v37, 4294901760
    %v534 = vsub.f32 %v37, %v533
    %535 = vmatpush2.msra.mxu0 %v534
    %536 = vmatprep.subr.mxu0 0.0
    %v537 = vand.u32 %v36, 4294901760
    %v538 = vsub.f32 %v36, %v537
    %539 = vmatpush2.msra.mxu0 %v538
    %540 = vmatprep.subr.mxu0 0.0
    %v541 = vand.u32 %v35, 4294901760
    %v542 = vsub.f32 %v35, %v541
    %543 = vmatpush2.msra.mxu0 %v542
    %544 = vmatprep.subr.mxu0 0.0
    %v545 = vand.u32 %v34, 4294901760
    %v546 = vsub.f32 %v34, %v545
    %547 = vmatpush2.msra.mxu0 %v546
    %548 = vmatprep.subr.mxu0 0.0
    %v549 = vand.u32 %v33, 4294901760
    %v550 = vsub.f32 %v33, %v549
    %551 = vmatpush2.msra.mxu0 %v550
    %552 = vmatprep.subr.mxu0 0.0
    %v553 = vand.u32 %v32, 4294901760
    %v554 = vsub.f32 %v32, %v553
    %555 = vmatpush2.msra.mxu0 %v554
    %v556 = vand.u32 %v80, 4294901760
    %v557 = vsub.f32 %v80, %v556
    %558 = vmatprep.mubr.f32.mxu0 %v557
    %v559 = vand.u32 %v72, 4294901760
    %v560 = vsub.f32 %v72, %v559
    %561 = vmatmul.mubr.f32.gmra.mxu0 %v560
    %v562 = vpop.f32.mrf.mxu0
    %v563 = vadd.f32 %v425, %v562
    %v564 = vpop.f32.mrf.mxu0
    %565 = vdwg.mxu0
    %566 = vmatprep.subr.mxu0 0.0
    %v567 = vand.u32 %v31, 4294901760
    %568 = vmatpush1.msra.mxu0 %v567
    %569 = vmatprep.subr.mxu0 0.0
    %v570 = vand.u32 %v30, 4294901760
    %571 = vmatpush1.msra.mxu0 %v570
    %572 = vmatprep.subr.mxu0 0.0
    %v573 = vand.u32 %v29, 4294901760
    %574 = vmatpush1.msra.mxu0 %v573
    %575 = vmatprep.subr.mxu0 0.0
    %v576 = vand.u32 %v28, 4294901760
    %577 = vmatpush1.msra.mxu0 %v576
    %578 = vmatprep.subr.mxu0 0.0
    %v579 = vand.u32 %v27, 4294901760
    %580 = vmatpush1.msra.mxu0 %v579
    %581 = vmatprep.subr.mxu0 0.0
    %v582 = vand.u32 %v26, 4294901760
    %583 = vmatpush1.msra.mxu0 %v582
    %584 = vmatprep.subr.mxu0 0.0
    %v585 = vand.u32 %v25, 4294901760
    %586 = vmatpush1.msra.mxu0 %v585
    %587 = vmatprep.subr.mxu0 0.0
    %v588 = vand.u32 %v24, 4294901760
    %589 = vmatpush1.msra.mxu0 %v588
    %590 = vmatprep.subr.mxu0 0.0
    %v591 = vand.u32 %v23, 4294901760
    %592 = vmatpush1.msra.mxu0 %v591
    %593 = vmatprep.subr.mxu0 0.0
    %v594 = vand.u32 %v22, 4294901760
    %595 = vmatpush1.msra.mxu0 %v594
    %596 = vmatprep.subr.mxu0 0.0
    %v597 = vand.u32 %v21, 4294901760
    %598 = vmatpush1.msra.mxu0 %v597
    %599 = vmatprep.subr.mxu0 0.0
    %v600 = vand.u32 %v20, 4294901760
    %601 = vmatpush1.msra.mxu0 %v600
    %602 = vmatprep.subr.mxu0 0.0
    %v603 = vand.u32 %v19, 4294901760
    %604 = vmatpush1.msra.mxu0 %v603
    %605 = vmatprep.subr.mxu0 0.0
    %v606 = vand.u32 %v18, 4294901760
    %607 = vmatpush1.msra.mxu0 %v606
    %608 = vmatprep.subr.mxu0 0.0
    %v609 = vand.u32 %v17, 4294901760
    %610 = vmatpush1.msra.mxu0 %v609
    %611 = vmatprep.subr.mxu0 0.0
    %v612 = vand.u32 %v16, 4294901760
    %613 = vmatpush1.msra.mxu0 %v612
    %614 = vmatprep.subr.mxu0 0.0
    %v615 = vand.u32 %v47, 4294901760
    %616 = vmatpush2.msra.mxu0 %v615
    %617 = vmatprep.subr.mxu0 0.0
    %v618 = vand.u32 %v46, 4294901760
    %619 = vmatpush2.msra.mxu0 %v618
    %620 = vmatprep.subr.mxu0 0.0
    %v621 = vand.u32 %v45, 4294901760
    %622 = vmatpush2.msra.mxu0 %v621
    %623 = vmatprep.subr.mxu0 0.0
    %v624 = vand.u32 %v44, 4294901760
    %625 = vmatpush2.msra.mxu0 %v624
    %626 = vmatprep.subr.mxu0 0.0
    %v627 = vand.u32 %v43, 4294901760
    %628 = vmatpush2.msra.mxu0 %v627
    %629 = vmatprep.subr.mxu0 0.0
    %v630 = vand.u32 %v42, 4294901760
    %631 = vmatpush2.msra.mxu0 %v630
    %632 = vmatprep.subr.mxu0 0.0
    %v633 = vand.u32 %v41, 4294901760
    %634 = vmatpush2.msra.mxu0 %v633
    %635 = vmatprep.subr.mxu0 0.0
    %v636 = vand.u32 %v40, 4294901760
    %637 = vmatpush2.msra.mxu0 %v636
    %638 = vmatprep.subr.mxu0 0.0
    %v639 = vand.u32 %v39, 4294901760
    %640 = vmatpush2.msra.mxu0 %v639
    %641 = vmatprep.subr.mxu0 0.0
    %v642 = vand.u32 %v38, 4294901760
    %643 = vmatpush2.msra.mxu0 %v642
    %644 = vmatprep.subr.mxu0 0.0
    %v645 = vand.u32 %v37, 4294901760
    %646 = vmatpush2.msra.mxu0 %v645
    %647 = vmatprep.subr.mxu0 0.0
    %v648 = vand.u32 %v36, 4294901760
    %649 = vmatpush2.msra.mxu0 %v648
    %650 = vmatprep.subr.mxu0 0.0
    %v651 = vand.u32 %v35, 4294901760
    %652 = vmatpush2.msra.mxu0 %v651
    %653 = vmatprep.subr.mxu0 0.0
    %v654 = vand.u32 %v34, 4294901760
    %655 = vmatpush2.msra.mxu0 %v654
    %656 = vmatprep.subr.mxu0 0.0
    %v657 = vand.u32 %v33, 4294901760
    %658 = vmatpush2.msra.mxu0 %v657
    %659 = vmatprep.subr.mxu0 0.0
    %v660 = vand.u32 %v32, 4294901760
    %661 = vmatpush2.msra.mxu0 %v660
    %v662 = vand.u32 %v80, 4294901760
    %v663 = vsub.f32 %v80, %v662
    %v664 = vand.u32 %v663, 4294901760
    %665 = vmatprep.mubr.f32.mxu0 %v664
    %v666 = vand.u32 %v72, 4294901760
    %v667 = vsub.f32 %v72, %v666
    %v668 = vand.u32 %v667, 4294901760
    %669 = vmatmul.mubr.f32.gmra.mxu0 %v668
    %v670 = vpop.f32.mrf.mxu0
    %v671 = vadd.f32 %v563, %v670
    %v672 = vpop.f32.mrf.mxu0
    %673 = vdwg.mxu0
    %674 = vmatprep.subr.mxu0 0.0
    %v675 = vand.u32 %v31, 4294901760
    %v676 = vsub.f32 %v31, %v675
    %v677 = vand.u32 %v676, 4294901760
    %678 = vmatpush1.msra.mxu0 %v677
    %679 = vmatprep.subr.mxu0 0.0
    %v680 = vand.u32 %v30, 4294901760
    %v681 = vsub.f32 %v30, %v680
    %v682 = vand.u32 %v681, 4294901760
    %683 = vmatpush1.msra.mxu0 %v682
    %684 = vmatprep.subr.mxu0 0.0
    %v685 = vand.u32 %v29, 4294901760
    %v686 = vsub.f32 %v29, %v685
    %v687 = vand.u32 %v686, 4294901760
    %688 = vmatpush1.msra.mxu0 %v687
    %689 = vmatprep.subr.mxu0 0.0
    %v690 = vand.u32 %v28, 4294901760
    %v691 = vsub.f32 %v28, %v690
    %v692 = vand.u32 %v691, 4294901760
    %693 = vmatpush1.msra.mxu0 %v692
    %694 = vmatprep.subr.mxu0 0.0
    %v695 = vand.u32 %v27, 4294901760
    %v696 = vsub.f32 %v27, %v695
    %v697 = vand.u32 %v696, 4294901760
    %698 = vmatpush1.msra.mxu0 %v697
    %699 = vmatprep.subr.mxu0 0.0
    %v700 = vand.u32 %v26, 4294901760
    %v701 = vsub.f32 %v26, %v700
    %v702 = vand.u32 %v701, 4294901760
    %703 = vmatpush1.msra.mxu0 %v702
    %704 = vmatprep.subr.mxu0 0.0
    %v705 = vand.u32 %v25, 4294901760
    %v706 = vsub.f32 %v25, %v705
    %v707 = vand.u32 %v706, 4294901760
    %708 = vmatpush1.msra.mxu0 %v707
    %709 = vmatprep.subr.mxu0 0.0
    %v710 = vand.u32 %v24, 4294901760
    %v711 = vsub.f32 %v24, %v710
    %v712 = vand.u32 %v711, 4294901760
    %713 = vmatpush1.msra.mxu0 %v712
    %714 = vmatprep.subr.mxu0 0.0
    %v715 = vand.u32 %v23, 4294901760
    %v716 = vsub.f32 %v23, %v715
    %v717 = vand.u32 %v716, 4294901760
    %718 = vmatpush1.msra.mxu0 %v717
    %719 = vmatprep.subr.mxu0 0.0
    %v720 = vand.u32 %v22, 4294901760
    %v721 = vsub.f32 %v22, %v720
    %v722 = vand.u32 %v721, 4294901760
    %723 = vmatpush1.msra.mxu0 %v722
    %724 = vmatprep.subr.mxu0 0.0
    %v725 = vand.u32 %v21, 4294901760
    %v726 = vsub.f32 %v21, %v725
    %v727 = vand.u32 %v726, 4294901760
    %728 = vmatpush1.msra.mxu0 %v727
    %729 = vmatprep.subr.mxu0 0.0
    %v730 = vand.u32 %v20, 4294901760
    %v731 = vsub.f32 %v20, %v730
    %v732 = vand.u32 %v731, 4294901760
    %733 = vmatpush1.msra.mxu0 %v732
    %734 = vmatprep.subr.mxu0 0.0
    %v735 = vand.u32 %v19, 4294901760
    %v736 = vsub.f32 %v19, %v735
    %v737 = vand.u32 %v736, 4294901760
    %738 = vmatpush1.msra.mxu0 %v737
    %739 = vmatprep.subr.mxu0 0.0
    %v740 = vand.u32 %v18, 4294901760
    %v741 = vsub.f32 %v18, %v740
    %v742 = vand.u32 %v741, 4294901760
    %743 = vmatpush1.msra.mxu0 %v742
    %744 = vmatprep.subr.mxu0 0.0
    %v745 = vand.u32 %v17, 4294901760
    %v746 = vsub.f32 %v17, %v745
    %v747 = vand.u32 %v746, 4294901760
    %748 = vmatpush1.msra.mxu0 %v747
    %749 = vmatprep.subr.mxu0 0.0
    %v750 = vand.u32 %v16, 4294901760
    %v751 = vsub.f32 %v16, %v750
    %v752 = vand.u32 %v751, 4294901760
    %753 = vmatpush1.msra.mxu0 %v752
    %754 = vmatprep.subr.mxu0 0.0
    %v755 = vand.u32 %v47, 4294901760
    %v756 = vsub.f32 %v47, %v755
    %v757 = vand.u32 %v756, 4294901760
    %758 = vmatpush2.msra.mxu0 %v757
    %759 = vmatprep.subr.mxu0 0.0
    %v760 = vand.u32 %v46, 4294901760
    %v761 = vsub.f32 %v46, %v760
    %v762 = vand.u32 %v761, 4294901760
    %763 = vmatpush2.msra.mxu0 %v762
    %764 = vmatprep.subr.mxu0 0.0
    %v765 = vand.u32 %v45, 4294901760
    %v766 = vsub.f32 %v45, %v765
    %v767 = vand.u32 %v766, 4294901760
    %768 = vmatpush2.msra.mxu0 %v767
    %769 = vmatprep.subr.mxu0 0.0
    %v770 = vand.u32 %v44, 4294901760
    %v771 = vsub.f32 %v44, %v770
    %v772 = vand.u32 %v771, 4294901760
    %773 = vmatpush2.msra.mxu0 %v772
    %774 = vmatprep.subr.mxu0 0.0
    %v775 = vand.u32 %v43, 4294901760
    %v776 = vsub.f32 %v43, %v775
    %v777 = vand.u32 %v776, 4294901760
    %778 = vmatpush2.msra.mxu0 %v777
    %779 = vmatprep.subr.mxu0 0.0
    %v780 = vand.u32 %v42, 4294901760
    %v781 = vsub.f32 %v42, %v780
    %v782 = vand.u32 %v781, 4294901760
    %783 = vmatpush2.msra.mxu0 %v782
    %784 = vmatprep.subr.mxu0 0.0
    %v785 = vand.u32 %v41, 4294901760
    %v786 = vsub.f32 %v41, %v785
    %v787 = vand.u32 %v786, 4294901760
    %788 = vmatpush2.msra.mxu0 %v787
    %789 = vmatprep.subr.mxu0 0.0
    %v790 = vand.u32 %v40, 4294901760
    %v791 = vsub.f32 %v40, %v790
    %v792 = vand.u32 %v791, 4294901760
    %793 = vmatpush2.msra.mxu0 %v792
    %794 = vmatprep.subr.mxu0 0.0
    %v795 = vand.u32 %v39, 4294901760
    %v796 = vsub.f32 %v39, %v795
    %v797 = vand.u32 %v796, 4294901760
    %798 = vmatpush2.msra.mxu0 %v797
    %799 = vmatprep.subr.mxu0 0.0
    %v800 = vand.u32 %v38, 4294901760
    %v801 = vsub.f32 %v38, %v800
    %v802 = vand.u32 %v801, 4294901760
    %803 = vmatpush2.msra.mxu0 %v802
    %804 = vmatprep.subr.mxu0 0.0
    %v805 = vand.u32 %v37, 4294901760
    %v806 = vsub.f32 %v37, %v805
    %v807 = vand.u32 %v806, 4294901760
    %808 = vmatpush2.msra.mxu0 %v807
    %809 = vmatprep.subr.mxu0 0.0
    %v810 = vand.u32 %v36, 4294901760
    %v811 = vsub.f32 %v36, %v810
    %v812 = vand.u32 %v811, 4294901760
    %813 = vmatpush2.msra.mxu0 %v812
    %814 = vmatprep.subr.mxu0 0.0
    %v815 = vand.u32 %v35, 4294901760
    %v816 = vsub.f32 %v35, %v815
    %v817 = vand.u32 %v816, 4294901760
    %818 = vmatpush2.msra.mxu0 %v817
    %819 = vmatprep.subr.mxu0 0.0
    %v820 = vand.u32 %v34, 4294901760
    %v821 = vsub.f32 %v34, %v820
    %v822 = vand.u32 %v821, 4294901760
    %823 = vmatpush2.msra.mxu0 %v822
    %824 = vmatprep.subr.mxu0 0.0
    %v825 = vand.u32 %v33, 4294901760
    %v826 = vsub.f32 %v33, %v825
    %v827 = vand.u32 %v826, 4294901760
    %828 = vmatpush2.msra.mxu0 %v827
    %829 = vmatprep.subr.mxu0 0.0
    %v830 = vand.u32 %v32, 4294901760
    %v831 = vsub.f32 %v32, %v830
    %v832 = vand.u32 %v831, 4294901760
    %833 = vmatpush2.msra.mxu0 %v832
    %v834 = vand.u32 %v80, 4294901760
    %835 = vmatprep.mubr.f32.mxu0 %v834
    %v836 = vand.u32 %v72, 4294901760
    %837 = vmatmul.mubr.f32.gmra.mxu0 %v836
    %v838 = vpop.f32.mrf.mxu0
    %v839 = vadd.f32 %v671, %v838
    %v840 = vpop.f32.mrf.mxu0
    %841 = vdwg.mxu0
    %842 = vmatprep.subr.mxu0 0.0
    %v843 = vand.u32 %v31, 4294901760
    %844 = vmatpush1.msra.mxu0 %v843
    %845 = vmatprep.subr.mxu0 0.0
    %v846 = vand.u32 %v30, 4294901760
    %847 = vmatpush1.msra.mxu0 %v846
    %848 = vmatprep.subr.mxu0 0.0
    %v849 = vand.u32 %v29, 4294901760
    %850 = vmatpush1.msra.mxu0 %v849
    %851 = vmatprep.subr.mxu0 0.0
    %v852 = vand.u32 %v28, 4294901760
    %853 = vmatpush1.msra.mxu0 %v852
    %854 = vmatprep.subr.mxu0 0.0
    %v855 = vand.u32 %v27, 4294901760
    %856 = vmatpush1.msra.mxu0 %v855
    %857 = vmatprep.subr.mxu0 0.0
    %v858 = vand.u32 %v26, 4294901760
    %859 = vmatpush1.msra.mxu0 %v858
    %860 = vmatprep.subr.mxu0 0.0
    %v861 = vand.u32 %v25, 4294901760
    %862 = vmatpush1.msra.mxu0 %v861
    %863 = vmatprep.subr.mxu0 0.0
    %v864 = vand.u32 %v24, 4294901760
    %865 = vmatpush1.msra.mxu0 %v864
    %866 = vmatprep.subr.mxu0 0.0
    %v867 = vand.u32 %v23, 4294901760
    %868 = vmatpush1.msra.mxu0 %v867
    %869 = vmatprep.subr.mxu0 0.0
    %v870 = vand.u32 %v22, 4294901760
    %871 = vmatpush1.msra.mxu0 %v870
    %872 = vmatprep.subr.mxu0 0.0
    %v873 = vand.u32 %v21, 4294901760
    %874 = vmatpush1.msra.mxu0 %v873
    %875 = vmatprep.subr.mxu0 0.0
    %v876 = vand.u32 %v20, 4294901760
    %877 = vmatpush1.msra.mxu0 %v876
    %878 = vmatprep.subr.mxu0 0.0
    %v879 = vand.u32 %v19, 4294901760
    %880 = vmatpush1.msra.mxu0 %v879
    %881 = vmatprep.subr.mxu0 0.0
    %v882 = vand.u32 %v18, 4294901760
    %883 = vmatpush1.msra.mxu0 %v882
    %884 = vmatprep.subr.mxu0 0.0
    %v885 = vand.u32 %v17, 4294901760
    %886 = vmatpush1.msra.mxu0 %v885
    %887 = vmatprep.subr.mxu0 0.0
    %v888 = vand.u32 %v16, 4294901760
    %889 = vmatpush1.msra.mxu0 %v888
    %890 = vmatprep.subr.mxu0 0.0
    %v891 = vand.u32 %v47, 4294901760
    %892 = vmatpush2.msra.mxu0 %v891
    %893 = vmatprep.subr.mxu0 0.0
    %v894 = vand.u32 %v46, 4294901760
    %895 = vmatpush2.msra.mxu0 %v894
    %896 = vmatprep.subr.mxu0 0.0
    %v897 = vand.u32 %v45, 4294901760
    %898 = vmatpush2.msra.mxu0 %v897
    %899 = vmatprep.subr.mxu0 0.0
    %v900 = vand.u32 %v44, 4294901760
    %901 = vmatpush2.msra.mxu0 %v900
    %902 = vmatprep.subr.mxu0 0.0
    %v903 = vand.u32 %v43, 4294901760
    %904 = vmatpush2.msra.mxu0 %v903
    %905 = vmatprep.subr.mxu0 0.0
    %v906 = vand.u32 %v42, 4294901760
    %907 = vmatpush2.msra.mxu0 %v906
    %908 = vmatprep.subr.mxu0 0.0
    %v909 = vand.u32 %v41, 4294901760
    %910 = vmatpush2.msra.mxu0 %v909
    %911 = vmatprep.subr.mxu0 0.0
    %v912 = vand.u32 %v40, 4294901760
    %913 = vmatpush2.msra.mxu0 %v912
    %914 = vmatprep.subr.mxu0 0.0
    %v915 = vand.u32 %v39, 4294901760
    %916 = vmatpush2.msra.mxu0 %v915
    %917 = vmatprep.subr.mxu0 0.0
    %v918 = vand.u32 %v38, 4294901760
    %919 = vmatpush2.msra.mxu0 %v918
    %920 = vmatprep.subr.mxu0 0.0
    %v921 = vand.u32 %v37, 4294901760
    %922 = vmatpush2.msra.mxu0 %v921
    %923 = vmatprep.subr.mxu0 0.0
    %v924 = vand.u32 %v36, 4294901760
    %925 = vmatpush2.msra.mxu0 %v924
    %926 = vmatprep.subr.mxu0 0.0
    %v927 = vand.u32 %v35, 4294901760
    %928 = vmatpush2.msra.mxu0 %v927
    %929 = vmatprep.subr.mxu0 0.0
    %v930 = vand.u32 %v34, 4294901760
    %931 = vmatpush2.msra.mxu0 %v930
    %932 = vmatprep.subr.mxu0 0.0
    %v933 = vand.u32 %v33, 4294901760
    %934 = vmatpush2.msra.mxu0 %v933
    %935 = vmatprep.subr.mxu0 0.0
    %v936 = vand.u32 %v32, 4294901760
    %937 = vmatpush2.msra.mxu0 %v936
    %v938 = vand.u32 %v80, 4294901760
    %939 = vmatprep.mubr.f32.mxu0 %v938
    %v940 = vand.u32 %v72, 4294901760
    %941 = vmatmul.mubr.f32.gmra.mxu0 %v940
    %v942 = vpop.f32.mrf.mxu0
    %v943 = vadd.f32 %v839, %v942
    %v944 = vpop.f32.mrf.mxu0
    %945 = vdwg.mxu0
    %946 = vmatprep.subr.mxu0 0.0
    %v947 = vand.u32 %v63, 4294901760
    %948 = vmatpush1.msra.mxu0 %v947
    %949 = vmatprep.subr.mxu0 0.0
    %v950 = vand.u32 %v62, 4294901760
    %951 = vmatpush1.msra.mxu0 %v950
    %952 = vmatprep.subr.mxu0 0.0
    %v953 = vand.u32 %v61, 4294901760
    %954 = vmatpush1.msra.mxu0 %v953
    %955 = vmatprep.subr.mxu0 0.0
    %v956 = vand.u32 %v60, 4294901760
    %957 = vmatpush1.msra.mxu0 %v956
    %958 = vmatprep.subr.mxu0 0.0
    %v959 = vand.u32 %v59, 4294901760
    %960 = vmatpush1.msra.mxu0 %v959
    %961 = vmatprep.subr.mxu0 0.0
    %v962 = vand.u32 %v58, 4294901760
    %963 = vmatpush1.msra.mxu0 %v962
    %964 = vmatprep.subr.mxu0 0.0
    %v965 = vand.u32 %v57, 4294901760
    %966 = vmatpush1.msra.mxu0 %v965
    %967 = vmatprep.subr.mxu0 0.0
    %v968 = vand.u32 %v56, 4294901760
    %969 = vmatpush1.msra.mxu0 %v968
    %970 = vmatprep.subr.mxu0 0.0
    %v971 = vand.u32 %v55, 4294901760
    %972 = vmatpush1.msra.mxu0 %v971
    %973 = vmatprep.subr.mxu0 0.0
    %v974 = vand.u32 %v54, 4294901760
    %975 = vmatpush1.msra.mxu0 %v974
    %976 = vmatprep.subr.mxu0 0.0
    %v977 = vand.u32 %v53, 4294901760
    %978 = vmatpush1.msra.mxu0 %v977
    %979 = vmatprep.subr.mxu0 0.0
    %v980 = vand.u32 %v52, 4294901760
    %981 = vmatpush1.msra.mxu0 %v980
    %982 = vmatprep.subr.mxu0 0.0
    %v983 = vand.u32 %v51, 4294901760
    %984 = vmatpush1.msra.mxu0 %v983
    %985 = vmatprep.subr.mxu0 0.0
    %v986 = vand.u32 %v50, 4294901760
    %987 = vmatpush1.msra.mxu0 %v986
    %988 = vmatprep.subr.mxu0 0.0
    %v989 = vand.u32 %v49, 4294901760
    %990 = vmatpush1.msra.mxu0 %v989
    %991 = vmatprep.subr.mxu0 0.0
    %v992 = vand.u32 %v48, 4294901760
    %993 = vmatpush1.msra.mxu0 %v992
    %994 = vmatprep.subr.mxu0 0.0
    %995 = vmatpush2.msra.mxu0 0.0
    %996 = vmatprep.subr.mxu0 0.0
    %997 = vmatpush2.msra.mxu0 0.0
    %998 = vmatprep.subr.mxu0 0.0
    %999 = vmatpush2.msra.mxu0 0.0
    %1000 = vmatprep.subr.mxu0 0.0
    %1001 = vmatpush2.msra.mxu0 0.0
    %1002 = vmatprep.subr.mxu0 0.0
    %1003 = vmatpush2.msra.mxu0 0.0
    %1004 = vmatprep.subr.mxu0 0.0
    %1005 = vmatpush2.msra.mxu0 0.0
    %1006 = vmatprep.subr.mxu0 0.0
    %1007 = vmatpush2.msra.mxu0 0.0
    %1008 = vmatprep.subr.mxu0 0.0
    %1009 = vmatpush2.msra.mxu0 0.0
    %1010 = vmatprep.subr.mxu0 0.0
    %1011 = vmatpush2.msra.mxu0 0.0
    %1012 = vmatprep.subr.mxu0 0.0
    %1013 = vmatpush2.msra.mxu0 0.0
    %1014 = vmatprep.subr.mxu0 0.0
    %1015 = vmatpush2.msra.mxu0 0.0
    %1016 = vmatprep.subr.mxu0 0.0
    %1017 = vmatpush2.msra.mxu0 0.0
    %1018 = vmatprep.subr.mxu0 0.0
    %1019 = vmatpush2.msra.mxu0 0.0
    %1020 = vmatprep.subr.mxu0 0.0
    %1021 = vmatpush2.msra.mxu0 0.0
    %1022 = vmatprep.subr.mxu0 0.0
    %1023 = vmatpush2.msra.mxu0 0.0
    %1024 = vmatprep.subr.mxu0 0.0
    %1025 = vmatpush2.msra.mxu0 0.0
    %1026 = vmatprep.mubr.f32.mxu0 0.0
    %v1027 = vand.u32 %v79, 4294901760
    %v1028 = vsub.f32 %v79, %v1027
    %v1029 = vand.u32 %v1028, 4294901760
    %v1030 = vsub.f32 %v1028, %v1029
    %v1031 = vand.u32 %v1030, 4294901760
    %1032 = vmatmul.mubr.f32.gmra.mxu0 %v1031
    %v1033 = vpop.f32.mrf.mxu0
    %v1034 = vadd.f32 %v943, %v1033
    %v1035 = vpop.f32.mrf.mxu0
    %1036 = vdwg.mxu0
    %1037 = vmatprep.subr.mxu0 0.0
    %v1038 = vand.u32 %v63, 4294901760
    %v1039 = vsub.f32 %v63, %v1038
    %v1040 = vand.u32 %v1039, 4294901760
    %v1041 = vsub.f32 %v1039, %v1040
    %v1042 = vand.u32 %v1041, 4294901760
    %1043 = vmatpush1.msra.mxu0 %v1042
    %1044 = vmatprep.subr.mxu0 0.0
    %v1045 = vand.u32 %v62, 4294901760
    %v1046 = vsub.f32 %v62, %v1045
    %v1047 = vand.u32 %v1046, 4294901760
    %v1048 = vsub.f32 %v1046, %v1047
    %v1049 = vand.u32 %v1048, 4294901760
    %1050 = vmatpush1.msra.mxu0 %v1049
    %1051 = vmatprep.subr.mxu0 0.0
    %v1052 = vand.u32 %v61, 4294901760
    %v1053 = vsub.f32 %v61, %v1052
    %v1054 = vand.u32 %v1053, 4294901760
    %v1055 = vsub.f32 %v1053, %v1054
    %v1056 = vand.u32 %v1055, 4294901760
    %1057 = vmatpush1.msra.mxu0 %v1056
    %1058 = vmatprep.subr.mxu0 0.0
    %v1059 = vand.u32 %v60, 4294901760
    %v1060 = vsub.f32 %v60, %v1059
    %v1061 = vand.u32 %v1060, 4294901760
    %v1062 = vsub.f32 %v1060, %v1061
    %v1063 = vand.u32 %v1062, 4294901760
    %1064 = vmatpush1.msra.mxu0 %v1063
    %1065 = vmatprep.subr.mxu0 0.0
    %v1066 = vand.u32 %v59, 4294901760
    %v1067 = vsub.f32 %v59, %v1066
    %v1068 = vand.u32 %v1067, 4294901760
    %v1069 = vsub.f32 %v1067, %v1068
    %v1070 = vand.u32 %v1069, 4294901760
    %1071 = vmatpush1.msra.mxu0 %v1070
    %1072 = vmatprep.subr.mxu0 0.0
    %v1073 = vand.u32 %v58, 4294901760
    %v1074 = vsub.f32 %v58, %v1073
    %v1075 = vand.u32 %v1074, 4294901760
    %v1076 = vsub.f32 %v1074, %v1075
    %v1077 = vand.u32 %v1076, 4294901760
    %1078 = vmatpush1.msra.mxu0 %v1077
    %1079 = vmatprep.subr.mxu0 0.0
    %v1080 = vand.u32 %v57, 4294901760
    %v1081 = vsub.f32 %v57, %v1080
    %v1082 = vand.u32 %v1081, 4294901760
    %v1083 = vsub.f32 %v1081, %v1082
    %v1084 = vand.u32 %v1083, 4294901760
    %1085 = vmatpush1.msra.mxu0 %v1084
    %1086 = vmatprep.subr.mxu0 0.0
    %v1087 = vand.u32 %v56, 4294901760
    %v1088 = vsub.f32 %v56, %v1087
    %v1089 = vand.u32 %v1088, 4294901760
    %v1090 = vsub.f32 %v1088, %v1089
    %v1091 = vand.u32 %v1090, 4294901760
    %1092 = vmatpush1.msra.mxu0 %v1091
    %1093 = vmatprep.subr.mxu0 0.0
    %v1094 = vand.u32 %v55, 4294901760
    %v1095 = vsub.f32 %v55, %v1094
    %v1096 = vand.u32 %v1095, 4294901760
    %v1097 = vsub.f32 %v1095, %v1096
    %v1098 = vand.u32 %v1097, 4294901760
    %1099 = vmatpush1.msra.mxu0 %v1098
    %1100 = vmatprep.subr.mxu0 0.0
    %v1101 = vand.u32 %v54, 4294901760
    %v1102 = vsub.f32 %v54, %v1101
    %v1103 = vand.u32 %v1102, 4294901760
    %v1104 = vsub.f32 %v1102, %v1103
    %v1105 = vand.u32 %v1104, 4294901760
    %1106 = vmatpush1.msra.mxu0 %v1105
    %1107 = vmatprep.subr.mxu0 0.0
    %v1108 = vand.u32 %v53, 4294901760
    %v1109 = vsub.f32 %v53, %v1108
    %v1110 = vand.u32 %v1109, 4294901760
    %v1111 = vsub.f32 %v1109, %v1110
    %v1112 = vand.u32 %v1111, 4294901760
    %1113 = vmatpush1.msra.mxu0 %v1112
    %1114 = vmatprep.subr.mxu0 0.0
    %v1115 = vand.u32 %v52, 4294901760
    %v1116 = vsub.f32 %v52, %v1115
    %v1117 = vand.u32 %v1116, 4294901760
    %v1118 = vsub.f32 %v1116, %v1117
    %v1119 = vand.u32 %v1118, 4294901760
    %1120 = vmatpush1.msra.mxu0 %v1119
    %1121 = vmatprep.subr.mxu0 0.0
    %v1122 = vand.u32 %v51, 4294901760
    %v1123 = vsub.f32 %v51, %v1122
    %v1124 = vand.u32 %v1123, 4294901760
    %v1125 = vsub.f32 %v1123, %v1124
    %v1126 = vand.u32 %v1125, 4294901760
    %1127 = vmatpush1.msra.mxu0 %v1126
    %1128 = vmatprep.subr.mxu0 0.0
    %v1129 = vand.u32 %v50, 4294901760
    %v1130 = vsub.f32 %v50, %v1129
    %v1131 = vand.u32 %v1130, 4294901760
    %v1132 = vsub.f32 %v1130, %v1131
    %v1133 = vand.u32 %v1132, 4294901760
    %1134 = vmatpush1.msra.mxu0 %v1133
    %1135 = vmatprep.subr.mxu0 0.0
    %v1136 = vand.u32 %v49, 4294901760
    %v1137 = vsub.f32 %v49, %v1136
    %v1138 = vand.u32 %v1137, 4294901760
    %v1139 = vsub.f32 %v1137, %v1138
    %v1140 = vand.u32 %v1139, 4294901760
    %1141 = vmatpush1.msra.mxu0 %v1140
    %1142 = vmatprep.subr.mxu0 0.0
    %v1143 = vand.u32 %v48, 4294901760
    %v1144 = vsub.f32 %v48, %v1143
    %v1145 = vand.u32 %v1144, 4294901760
    %v1146 = vsub.f32 %v1144, %v1145
    %v1147 = vand.u32 %v1146, 4294901760
    %1148 = vmatpush1.msra.mxu0 %v1147
    %1149 = vmatprep.subr.mxu0 0.0
    %1150 = vmatpush2.msra.mxu0 0.0
    %1151 = vmatprep.subr.mxu0 0.0
    %1152 = vmatpush2.msra.mxu0 0.0
    %1153 = vmatprep.subr.mxu0 0.0
    %1154 = vmatpush2.msra.mxu0 0.0
    %1155 = vmatprep.subr.mxu0 0.0
    %1156 = vmatpush2.msra.mxu0 0.0
    %1157 = vmatprep.subr.mxu0 0.0
    %1158 = vmatpush2.msra.mxu0 0.0
    %1159 = vmatprep.subr.mxu0 0.0
    %1160 = vmatpush2.msra.mxu0 0.0
    %1161 = vmatprep.subr.mxu0 0.0
    %1162 = vmatpush2.msra.mxu0 0.0
    %1163 = vmatprep.subr.mxu0 0.0
    %1164 = vmatpush2.msra.mxu0 0.0
    %1165 = vmatprep.subr.mxu0 0.0
    %1166 = vmatpush2.msra.mxu0 0.0
    %1167 = vmatprep.subr.mxu0 0.0
    %1168 = vmatpush2.msra.mxu0 0.0
    %1169 = vmatprep.subr.mxu0 0.0
    %1170 = vmatpush2.msra.mxu0 0.0
    %1171 = vmatprep.subr.mxu0 0.0
    %1172 = vmatpush2.msra.mxu0 0.0
    %1173 = vmatprep.subr.mxu0 0.0
    %1174 = vmatpush2.msra.mxu0 0.0
    %1175 = vmatprep.subr.mxu0 0.0
    %1176 = vmatpush2.msra.mxu0 0.0
    %1177 = vmatprep.subr.mxu0 0.0
    %1178 = vmatpush2.msra.mxu0 0.0
    %1179 = vmatprep.subr.mxu0 0.0
    %1180 = vmatpush2.msra.mxu0 0.0
    %1181 = vmatprep.mubr.f32.mxu0 0.0
    %v1182 = vand.u32 %v79, 4294901760
    %1183 = vmatmul.mubr.f32.gmra.mxu0 %v1182
    %v1184 = vpop.f32.mrf.mxu0
    %v1185 = vadd.f32 %v1034, %v1184
    %v1186 = vpop.f32.mrf.mxu0
    %1187 = vdwg.mxu0
    %1188 = vmatprep.subr.mxu0 0.0
    %v1189 = vand.u32 %v63, 4294901760
    %v1190 = vsub.f32 %v63, %v1189
    %1191 = vmatpush1.msra.mxu0 %v1190
    %1192 = vmatprep.subr.mxu0 0.0
    %v1193 = vand.u32 %v62, 4294901760
    %v1194 = vsub.f32 %v62, %v1193
    %1195 = vmatpush1.msra.mxu0 %v1194
    %1196 = vmatprep.subr.mxu0 0.0
    %v1197 = vand.u32 %v61, 4294901760
    %v1198 = vsub.f32 %v61, %v1197
    %1199 = vmatpush1.msra.mxu0 %v1198
    %1200 = vmatprep.subr.mxu0 0.0
    %v1201 = vand.u32 %v60, 4294901760
    %v1202 = vsub.f32 %v60, %v1201
    %1203 = vmatpush1.msra.mxu0 %v1202
    %1204 = vmatprep.subr.mxu0 0.0
    %v1205 = vand.u32 %v59, 4294901760
    %v1206 = vsub.f32 %v59, %v1205
    %1207 = vmatpush1.msra.mxu0 %v1206
    %1208 = vmatprep.subr.mxu0 0.0
    %v1209 = vand.u32 %v58, 4294901760
    %v1210 = vsub.f32 %v58, %v1209
    %1211 = vmatpush1.msra.mxu0 %v1210
    %1212 = vmatprep.subr.mxu0 0.0
    %v1213 = vand.u32 %v57, 4294901760
    %v1214 = vsub.f32 %v57, %v1213
    %1215 = vmatpush1.msra.mxu0 %v1214
    %1216 = vmatprep.subr.mxu0 0.0
    %v1217 = vand.u32 %v56, 4294901760
    %v1218 = vsub.f32 %v56, %v1217
    %1219 = vmatpush1.msra.mxu0 %v1218
    %1220 = vmatprep.subr.mxu0 0.0
    %v1221 = vand.u32 %v55, 4294901760
    %v1222 = vsub.f32 %v55, %v1221
    %1223 = vmatpush1.msra.mxu0 %v1222
    %1224 = vmatprep.subr.mxu0 0.0
    %v1225 = vand.u32 %v54, 4294901760
    %v1226 = vsub.f32 %v54, %v1225
    %1227 = vmatpush1.msra.mxu0 %v1226
    %1228 = vmatprep.subr.mxu0 0.0
    %v1229 = vand.u32 %v53, 4294901760
    %v1230 = vsub.f32 %v53, %v1229
    %1231 = vmatpush1.msra.mxu0 %v1230
    %1232 = vmatprep.subr.mxu0 0.0
    %v1233 = vand.u32 %v52, 4294901760
    %v1234 = vsub.f32 %v52, %v1233
    %1235 = vmatpush1.msra.mxu0 %v1234
    %1236 = vmatprep.subr.mxu0 0.0
    %v1237 = vand.u32 %v51, 4294901760
    %v1238 = vsub.f32 %v51, %v1237
    %1239 = vmatpush1.msra.mxu0 %v1238
    %1240 = vmatprep.subr.mxu0 0.0
    %v1241 = vand.u32 %v50, 4294901760
    %v1242 = vsub.f32 %v50, %v1241
    %1243 = vmatpush1.msra.mxu0 %v1242
    %1244 = vmatprep.subr.mxu0 0.0
    %v1245 = vand.u32 %v49, 4294901760
    %v1246 = vsub.f32 %v49, %v1245
    %1247 = vmatpush1.msra.mxu0 %v1246
    %1248 = vmatprep.subr.mxu0 0.0
    %v1249 = vand.u32 %v48, 4294901760
    %v1250 = vsub.f32 %v48, %v1249
    %1251 = vmatpush1.msra.mxu0 %v1250
    %1252 = vmatprep.subr.mxu0 0.0
    %1253 = vmatpush2.msra.mxu0 0.0
    %1254 = vmatprep.subr.mxu0 0.0
    %1255 = vmatpush2.msra.mxu0 0.0
    %1256 = vmatprep.subr.mxu0 0.0
    %1257 = vmatpush2.msra.mxu0 0.0
    %1258 = vmatprep.subr.mxu0 0.0
    %1259 = vmatpush2.msra.mxu0 0.0
    %1260 = vmatprep.subr.mxu0 0.0
    %1261 = vmatpush2.msra.mxu0 0.0
    %1262 = vmatprep.subr.mxu0 0.0
    %1263 = vmatpush2.msra.mxu0 0.0
    %1264 = vmatprep.subr.mxu0 0.0
    %1265 = vmatpush2.msra.mxu0 0.0
    %1266 = vmatprep.subr.mxu0 0.0
    %1267 = vmatpush2.msra.mxu0 0.0
    %1268 = vmatprep.subr.mxu0 0.0
    %1269 = vmatpush2.msra.mxu0 0.0
    %1270 = vmatprep.subr.mxu0 0.0
    %1271 = vmatpush2.msra.mxu0 0.0
    %1272 = vmatprep.subr.mxu0 0.0
    %1273 = vmatpush2.msra.mxu0 0.0
    %1274 = vmatprep.subr.mxu0 0.0
    %1275 = vmatpush2.msra.mxu0 0.0
    %1276 = vmatprep.subr.mxu0 0.0
    %1277 = vmatpush2.msra.mxu0 0.0
    %1278 = vmatprep.subr.mxu0 0.0
    %1279 = vmatpush2.msra.mxu0 0.0
    %1280 = vmatprep.subr.mxu0 0.0
    %1281 = vmatpush2.msra.mxu0 0.0
    %1282 = vmatprep.subr.mxu0 0.0
    %1283 = vmatpush2.msra.mxu0 0.0
    %1284 = vmatprep.mubr.f32.mxu0 0.0
    %v1285 = vand.u32 %v79, 4294901760
    %v1286 = vsub.f32 %v79, %v1285
    %1287 = vmatmul.mubr.f32.gmra.mxu0 %v1286
    %v1288 = vpop.f32.mrf.mxu0
    %v1289 = vadd.f32 %v1185, %v1288
    %v1290 = vpop.f32.mrf.mxu0
    %1291 = vdwg.mxu0
    %1292 = vmatprep.subr.mxu0 0.0
    %v1293 = vand.u32 %v63, 4294901760
    %1294 = vmatpush1.msra.mxu0 %v1293
    %1295 = vmatprep.subr.mxu0 0.0
    %v1296 = vand.u32 %v62, 4294901760
    %1297 = vmatpush1.msra.mxu0 %v1296
    %1298 = vmatprep.subr.mxu0 0.0
    %v1299 = vand.u32 %v61, 4294901760
    %1300 = vmatpush1.msra.mxu0 %v1299
    %1301 = vmatprep.subr.mxu0 0.0
    %v1302 = vand.u32 %v60, 4294901760
    %1303 = vmatpush1.msra.mxu0 %v1302
    %1304 = vmatprep.subr.mxu0 0.0
    %v1305 = vand.u32 %v59, 4294901760
    %1306 = vmatpush1.msra.mxu0 %v1305
    %1307 = vmatprep.subr.mxu0 0.0
    %v1308 = vand.u32 %v58, 4294901760
    %1309 = vmatpush1.msra.mxu0 %v1308
    %1310 = vmatprep.subr.mxu0 0.0
    %v1311 = vand.u32 %v57, 4294901760
    %1312 = vmatpush1.msra.mxu0 %v1311
    %1313 = vmatprep.subr.mxu0 0.0
    %v1314 = vand.u32 %v56, 4294901760
    %1315 = vmatpush1.msra.mxu0 %v1314
    %1316 = vmatprep.subr.mxu0 0.0
    %v1317 = vand.u32 %v55, 4294901760
    %1318 = vmatpush1.msra.mxu0 %v1317
    %1319 = vmatprep.subr.mxu0 0.0
    %v1320 = vand.u32 %v54, 4294901760
    %1321 = vmatpush1.msra.mxu0 %v1320
    %1322 = vmatprep.subr.mxu0 0.0
    %v1323 = vand.u32 %v53, 4294901760
    %1324 = vmatpush1.msra.mxu0 %v1323
    %1325 = vmatprep.subr.mxu0 0.0
    %v1326 = vand.u32 %v52, 4294901760
    %1327 = vmatpush1.msra.mxu0 %v1326
    %1328 = vmatprep.subr.mxu0 0.0
    %v1329 = vand.u32 %v51, 4294901760
    %1330 = vmatpush1.msra.mxu0 %v1329
    %1331 = vmatprep.subr.mxu0 0.0
    %v1332 = vand.u32 %v50, 4294901760
    %1333 = vmatpush1.msra.mxu0 %v1332
    %1334 = vmatprep.subr.mxu0 0.0
    %v1335 = vand.u32 %v49, 4294901760
    %1336 = vmatpush1.msra.mxu0 %v1335
    %1337 = vmatprep.subr.mxu0 0.0
    %v1338 = vand.u32 %v48, 4294901760
    %1339 = vmatpush1.msra.mxu0 %v1338
    %1340 = vmatprep.subr.mxu0 0.0
    %1341 = vmatpush2.msra.mxu0 0.0
    %1342 = vmatprep.subr.mxu0 0.0
    %1343 = vmatpush2.msra.mxu0 0.0
    %1344 = vmatprep.subr.mxu0 0.0
    %1345 = vmatpush2.msra.mxu0 0.0
    %1346 = vmatprep.subr.mxu0 0.0
    %1347 = vmatpush2.msra.mxu0 0.0
    %1348 = vmatprep.subr.mxu0 0.0
    %1349 = vmatpush2.msra.mxu0 0.0
    %1350 = vmatprep.subr.mxu0 0.0
    %1351 = vmatpush2.msra.mxu0 0.0
    %1352 = vmatprep.subr.mxu0 0.0
    %1353 = vmatpush2.msra.mxu0 0.0
    %1354 = vmatprep.subr.mxu0 0.0
    %1355 = vmatpush2.msra.mxu0 0.0
    %1356 = vmatprep.subr.mxu0 0.0
    %1357 = vmatpush2.msra.mxu0 0.0
    %1358 = vmatprep.subr.mxu0 0.0
    %1359 = vmatpush2.msra.mxu0 0.0
    %1360 = vmatprep.subr.mxu0 0.0
    %1361 = vmatpush2.msra.mxu0 0.0
    %1362 = vmatprep.subr.mxu0 0.0
    %1363 = vmatpush2.msra.mxu0 0.0
    %1364 = vmatprep.subr.mxu0 0.0
    %1365 = vmatpush2.msra.mxu0 0.0
    %1366 = vmatprep.subr.mxu0 0.0
    %1367 = vmatpush2.msra.mxu0 0.0
    %1368 = vmatprep.subr.mxu0 0.0
    %1369 = vmatpush2.msra.mxu0 0.0
    %1370 = vmatprep.subr.mxu0 0.0
    %1371 = vmatpush2.msra.mxu0 0.0
    %1372 = vmatprep.mubr.f32.mxu0 0.0
    %v1373 = vand.u32 %v79, 4294901760
    %v1374 = vsub.f32 %v79, %v1373
    %v1375 = vand.u32 %v1374, 4294901760
    %1376 = vmatmul.mubr.f32.gmra.mxu0 %v1375
    %v1377 = vpop.f32.mrf.mxu0
    %v1378 = vadd.f32 %v1289, %v1377
    %v1379 = vpop.f32.mrf.mxu0
    %1380 = vdwg.mxu0
    %1381 = vmatprep.subr.mxu0 0.0
    %v1382 = vand.u32 %v63, 4294901760
    %v1383 = vsub.f32 %v63, %v1382
    %v1384 = vand.u32 %v1383, 4294901760
    %1385 = vmatpush1.msra.mxu0 %v1384
    %1386 = vmatprep.subr.mxu0 0.0
    %v1387 = vand.u32 %v62, 4294901760
    %v1388 = vsub.f32 %v62, %v1387
    %v1389 = vand.u32 %v1388, 4294901760
    %1390 = vmatpush1.msra.mxu0 %v1389
    %1391 = vmatprep.subr.mxu0 0.0
    %v1392 = vand.u32 %v61, 4294901760
    %v1393 = vsub.f32 %v61, %v1392
    %v1394 = vand.u32 %v1393, 4294901760
    %1395 = vmatpush1.msra.mxu0 %v1394
    %1396 = vmatprep.subr.mxu0 0.0
    %v1397 = vand.u32 %v60, 4294901760
    %v1398 = vsub.f32 %v60, %v1397
    %v1399 = vand.u32 %v1398, 4294901760
    %1400 = vmatpush1.msra.mxu0 %v1399
    %1401 = vmatprep.subr.mxu0 0.0
    %v1402 = vand.u32 %v59, 4294901760
    %v1403 = vsub.f32 %v59, %v1402
    %v1404 = vand.u32 %v1403, 4294901760
    %1405 = vmatpush1.msra.mxu0 %v1404
    %1406 = vmatprep.subr.mxu0 0.0
    %v1407 = vand.u32 %v58, 4294901760
    %v1408 = vsub.f32 %v58, %v1407
    %v1409 = vand.u32 %v1408, 4294901760
    %1410 = vmatpush1.msra.mxu0 %v1409
    %1411 = vmatprep.subr.mxu0 0.0
    %v1412 = vand.u32 %v57, 4294901760
    %v1413 = vsub.f32 %v57, %v1412
    %v1414 = vand.u32 %v1413, 4294901760
    %1415 = vmatpush1.msra.mxu0 %v1414
    %1416 = vmatprep.subr.mxu0 0.0
    %v1417 = vand.u32 %v56, 4294901760
    %v1418 = vsub.f32 %v56, %v1417
    %v1419 = vand.u32 %v1418, 4294901760
    %1420 = vmatpush1.msra.mxu0 %v1419
    %1421 = vmatprep.subr.mxu0 0.0
    %v1422 = vand.u32 %v55, 4294901760
    %v1423 = vsub.f32 %v55, %v1422
    %v1424 = vand.u32 %v1423, 4294901760
    %1425 = vmatpush1.msra.mxu0 %v1424
    %1426 = vmatprep.subr.mxu0 0.0
    %v1427 = vand.u32 %v54, 4294901760
    %v1428 = vsub.f32 %v54, %v1427
    %v1429 = vand.u32 %v1428, 4294901760
    %1430 = vmatpush1.msra.mxu0 %v1429
    %1431 = vmatprep.subr.mxu0 0.0
    %v1432 = vand.u32 %v53, 4294901760
    %v1433 = vsub.f32 %v53, %v1432
    %v1434 = vand.u32 %v1433, 4294901760
    %1435 = vmatpush1.msra.mxu0 %v1434
    %1436 = vmatprep.subr.mxu0 0.0
    %v1437 = vand.u32 %v52, 4294901760
    %v1438 = vsub.f32 %v52, %v1437
    %v1439 = vand.u32 %v1438, 4294901760
    %1440 = vmatpush1.msra.mxu0 %v1439
    %1441 = vmatprep.subr.mxu0 0.0
    %v1442 = vand.u32 %v51, 4294901760
    %v1443 = vsub.f32 %v51, %v1442
    %v1444 = vand.u32 %v1443, 4294901760
    %1445 = vmatpush1.msra.mxu0 %v1444
    %1446 = vmatprep.subr.mxu0 0.0
    %v1447 = vand.u32 %v50, 4294901760
    %v1448 = vsub.f32 %v50, %v1447
    %v1449 = vand.u32 %v1448, 4294901760
    %1450 = vmatpush1.msra.mxu0 %v1449
    %1451 = vmatprep.subr.mxu0 0.0
    %v1452 = vand.u32 %v49, 4294901760
    %v1453 = vsub.f32 %v49, %v1452
    %v1454 = vand.u32 %v1453, 4294901760
    %1455 = vmatpush1.msra.mxu0 %v1454
    %1456 = vmatprep.subr.mxu0 0.0
    %v1457 = vand.u32 %v48, 4294901760
    %v1458 = vsub.f32 %v48, %v1457
    %v1459 = vand.u32 %v1458, 4294901760
    %1460 = vmatpush1.msra.mxu0 %v1459
    %1461 = vmatprep.subr.mxu0 0.0
    %1462 = vmatpush2.msra.mxu0 0.0
    %1463 = vmatprep.subr.mxu0 0.0
    %1464 = vmatpush2.msra.mxu0 0.0
    %1465 = vmatprep.subr.mxu0 0.0
    %1466 = vmatpush2.msra.mxu0 0.0
    %1467 = vmatprep.subr.mxu0 0.0
    %1468 = vmatpush2.msra.mxu0 0.0
    %1469 = vmatprep.subr.mxu0 0.0
    %1470 = vmatpush2.msra.mxu0 0.0
    %1471 = vmatprep.subr.mxu0 0.0
    %1472 = vmatpush2.msra.mxu0 0.0
    %1473 = vmatprep.subr.mxu0 0.0
    %1474 = vmatpush2.msra.mxu0 0.0
    %1475 = vmatprep.subr.mxu0 0.0
    %1476 = vmatpush2.msra.mxu0 0.0
    %1477 = vmatprep.subr.mxu0 0.0
    %1478 = vmatpush2.msra.mxu0 0.0
    %1479 = vmatprep.subr.mxu0 0.0
    %1480 = vmatpush2.msra.mxu0 0.0
    %1481 = vmatprep.subr.mxu0 0.0
    %1482 = vmatpush2.msra.mxu0 0.0
    %1483 = vmatprep.subr.mxu0 0.0
    %1484 = vmatpush2.msra.mxu0 0.0
    %1485 = vmatprep.subr.mxu0 0.0
    %1486 = vmatpush2.msra.mxu0 0.0
    %1487 = vmatprep.subr.mxu0 0.0
    %1488 = vmatpush2.msra.mxu0 0.0
    %1489 = vmatprep.subr.mxu0 0.0
    %1490 = vmatpush2.msra.mxu0 0.0
    %1491 = vmatprep.subr.mxu0 0.0
    %1492 = vmatpush2.msra.mxu0 0.0
    %1493 = vmatprep.mubr.f32.mxu0 0.0
    %v1494 = vand.u32 %v79, 4294901760
    %1495 = vmatmul.mubr.f32.gmra.mxu0 %v1494
    %v1496 = vpop.f32.mrf.mxu0
    %v1497 = vadd.f32 %v1378, %v1496
    %v1498 = vpop.f32.mrf.mxu0
    %1499 = vdwg.mxu0
    %1500 = vmatprep.subr.mxu0 0.0
    %v1501 = vand.u32 %v63, 4294901760
    %1502 = vmatpush1.msra.mxu0 %v1501
    %1503 = vmatprep.subr.mxu0 0.0
    %v1504 = vand.u32 %v62, 4294901760
    %1505 = vmatpush1.msra.mxu0 %v1504
    %1506 = vmatprep.subr.mxu0 0.0
    %v1507 = vand.u32 %v61, 4294901760
    %1508 = vmatpush1.msra.mxu0 %v1507
    %1509 = vmatprep.subr.mxu0 0.0
    %v1510 = vand.u32 %v60, 4294901760
    %1511 = vmatpush1.msra.mxu0 %v1510
    %1512 = vmatprep.subr.mxu0 0.0
    %v1513 = vand.u32 %v59, 4294901760
    %1514 = vmatpush1.msra.mxu0 %v1513
    %1515 = vmatprep.subr.mxu0 0.0
    %v1516 = vand.u32 %v58, 4294901760
    %1517 = vmatpush1.msra.mxu0 %v1516
    %1518 = vmatprep.subr.mxu0 0.0
    %v1519 = vand.u32 %v57, 4294901760
    %1520 = vmatpush1.msra.mxu0 %v1519
    %1521 = vmatprep.subr.mxu0 0.0
    %v1522 = vand.u32 %v56, 4294901760
    %1523 = vmatpush1.msra.mxu0 %v1522
    %1524 = vmatprep.subr.mxu0 0.0
    %v1525 = vand.u32 %v55, 4294901760
    %1526 = vmatpush1.msra.mxu0 %v1525
    %1527 = vmatprep.subr.mxu0 0.0
    %v1528 = vand.u32 %v54, 4294901760
    %1529 = vmatpush1.msra.mxu0 %v1528
    %1530 = vmatprep.subr.mxu0 0.0
    %v1531 = vand.u32 %v53, 4294901760
    %1532 = vmatpush1.msra.mxu0 %v1531
    %1533 = vmatprep.subr.mxu0 0.0
    %v1534 = vand.u32 %v52, 4294901760
    %1535 = vmatpush1.msra.mxu0 %v1534
    %1536 = vmatprep.subr.mxu0 0.0
    %v1537 = vand.u32 %v51, 4294901760
    %1538 = vmatpush1.msra.mxu0 %v1537
    %1539 = vmatprep.subr.mxu0 0.0
    %v1540 = vand.u32 %v50, 4294901760
    %1541 = vmatpush1.msra.mxu0 %v1540
    %1542 = vmatprep.subr.mxu0 0.0
    %v1543 = vand.u32 %v49, 4294901760
    %1544 = vmatpush1.msra.mxu0 %v1543
    %1545 = vmatprep.subr.mxu0 0.0
    %v1546 = vand.u32 %v48, 4294901760
    %1547 = vmatpush1.msra.mxu0 %v1546
    %1548 = vmatprep.subr.mxu0 0.0
    %1549 = vmatpush2.msra.mxu0 0.0
    %1550 = vmatprep.subr.mxu0 0.0
    %1551 = vmatpush2.msra.mxu0 0.0
    %1552 = vmatprep.subr.mxu0 0.0
    %1553 = vmatpush2.msra.mxu0 0.0
    %1554 = vmatprep.subr.mxu0 0.0
    %1555 = vmatpush2.msra.mxu0 0.0
    %1556 = vmatprep.subr.mxu0 0.0
    %1557 = vmatpush2.msra.mxu0 0.0
    %1558 = vmatprep.subr.mxu0 0.0
    %1559 = vmatpush2.msra.mxu0 0.0
    %1560 = vmatprep.subr.mxu0 0.0
    %1561 = vmatpush2.msra.mxu0 0.0
    %1562 = vmatprep.subr.mxu0 0.0
    %1563 = vmatpush2.msra.mxu0 0.0
    %1564 = vmatprep.subr.mxu0 0.0
    %1565 = vmatpush2.msra.mxu0 0.0
    %1566 = vmatprep.subr.mxu0 0.0
    %1567 = vmatpush2.msra.mxu0 0.0
    %1568 = vmatprep.subr.mxu0 0.0
    %1569 = vmatpush2.msra.mxu0 0.0
    %1570 = vmatprep.subr.mxu0 0.0
    %1571 = vmatpush2.msra.mxu0 0.0
    %1572 = vmatprep.subr.mxu0 0.0
    %1573 = vmatpush2.msra.mxu0 0.0
    %1574 = vmatprep.subr.mxu0 0.0
    %1575 = vmatpush2.msra.mxu0 0.0
    %1576 = vmatprep.subr.mxu0 0.0
    %1577 = vmatpush2.msra.mxu0 0.0
    %1578 = vmatprep.subr.mxu0 0.0
    %1579 = vmatpush2.msra.mxu0 0.0
    %1580 = vmatprep.mubr.f32.mxu0 0.0
    %v1581 = vand.u32 %v79, 4294901760
    %1582 = vmatmul.mubr.f32.gmra.mxu0 %v1581
    %v1583 = vpop.f32.mrf.mxu0
    %v1584 = vadd.f32 %v1497, %v1583
    %v1585 = vpop.f32.mrf.mxu0
    %1586 = vdwg.mxu0
    %vm1587 = vcmask 779264
    %v1588 = vsel %vm1587, %v1584, -inf
    %v1589 = vrot.slane %v1588, 4
    %v1590 = vmax.f32 %v1588, %v1589
    %v1591 = vrot.slane %v1590, 2
    %v1592 = vmax.f32 %v1590, %v1591
    %v1593 = vrot.slane %v1592, 1
    %v1594 = vmax.f32 %v1592, %v1593
    %v1595 = vsub.f32 %v1584, %v1594
    %v1596 = vmul.f32 %v1595, 1.442695
    %v1597 = vpow.pop %v1596
    %v1598 = vsel %vm1587, %v1597, 0.0
    %v1599 = vrot.slane %v1598, 4
    %v1600 = vadd.f32 %v1598, %v1599
    %v1601 = vrot.slane %v1600, 2
    %v1602 = vadd.f32 %v1600, %v1601
    %v1603 = vrot.slane %v1602, 1
    %v1604 = vadd.f32 %v1602, %v1603
    %v1605 = vrcp.pop %v1604
    %v1606 = vmul.f32 %v1597, %v1605
    %v1607 = vmul.f32 %v1606, %v15
    %v1608 = vld [vmem:[%s2] sm:$0xff]
    %v1609 = vld [vmem:[%s2 + $0x8] sm:$0xff]
    %v1610 = vld [vmem:[%s2 + $0x10] sm:$0xff]
    %v1611 = vld [vmem:[%s2 + $0x18] sm:$0xff]
    %v1612 = vld [vmem:[%s2 + $0x20] sm:$0xff]
    %v1613 = vld [vmem:[%s2 + $0x28] sm:$0xff]
    %v1614 = vld [vmem:[%s2 + $0x30] sm:$0xff]
    %v1615 = vld [vmem:[%s2 + $0x38] sm:$0xff]
    %v1616 = vld [vmem:[%s2 + $0x40] sm:$0xff]
    %v1617 = vld [vmem:[%s2 + $0x48] sm:$0xff]
    %v1618 = vld [vmem:[%s2 + $0x50] sm:$0xff]
    %v1619 = vld [vmem:[%s2 + $0x58] sm:$0xff]
    %v1620 = vld [vmem:[%s2 + $0x60] sm:$0x1]
    %v1621 = vlaneseq
    %v1622 = vshrl.u32 %v1621, 7
    %v1623 = vsub.s32 0, %v1622
    %v1624 = vrot.slane %v1620, %v1623
    %vm1625 = vcmask 785408
    %v1627 = vsel %vm1625, %v1607, 0
    %1629 = vmatprep.subr.mxu0 0.0
    %1630 = vmatpush1.msra.mxu0 0.0
    %1631 = vmatprep.subr.mxu0 0.0
    %1632 = vmatpush1.msra.mxu0 0.0
    %1633 = vmatprep.subr.mxu0 0.0
    %1634 = vmatpush1.msra.mxu0 0.0
    %1635 = vmatprep.subr.mxu0 0.0
    %1636 = vmatpush1.msra.mxu0 0.0
    %1637 = vmatprep.subr.mxu0 0.0
    %v1638 = vand.u32 %v1619, 4294901760
    %1639 = vmatpush1.msra.mxu0 %v1638
    %1640 = vmatprep.subr.mxu0 0.0
    %v1641 = vand.u32 %v1618, 4294901760
    %1642 = vmatpush1.msra.mxu0 %v1641
    %1643 = vmatprep.subr.mxu0 0.0
    %v1644 = vand.u32 %v1617, 4294901760
    %1645 = vmatpush1.msra.mxu0 %v1644
    %1646 = vmatprep.subr.mxu0 0.0
    %v1647 = vand.u32 %v1616, 4294901760
    %1648 = vmatpush1.msra.mxu0 %v1647
    %1649 = vmatprep.subr.mxu0 0.0
    %v1650 = vand.u32 %v1615, 4294901760
    %1651 = vmatpush1.msra.mxu0 %v1650
    %1652 = vmatprep.subr.mxu0 0.0
    %v1653 = vand.u32 %v1614, 4294901760
    %1654 = vmatpush1.msra.mxu0 %v1653
    %1655 = vmatprep.subr.mxu0 0.0
    %v1656 = vand.u32 %v1613, 4294901760
    %1657 = vmatpush1.msra.mxu0 %v1656
    %1658 = vmatprep.subr.mxu0 0.0
    %v1659 = vand.u32 %v1612, 4294901760
    %1660 = vmatpush1.msra.mxu0 %v1659
    %1661 = vmatprep.subr.mxu0 0.0
    %v1662 = vand.u32 %v1611, 4294901760
    %1663 = vmatpush1.msra.mxu0 %v1662
    %1664 = vmatprep.subr.mxu0 0.0
    %v1665 = vand.u32 %v1610, 4294901760
    %1666 = vmatpush1.msra.mxu0 %v1665
    %1667 = vmatprep.subr.mxu0 0.0
    %v1668 = vand.u32 %v1609, 4294901760
    %1669 = vmatpush1.msra.mxu0 %v1668
    %1670 = vmatprep.subr.mxu0 0.0
    %v1671 = vand.u32 %v1608, 4294901760
    %1672 = vmatpush1.msra.mxu0 %v1671
    %1673 = vmatprep.subr.mxu0 0.0
    %1674 = vmatpush2.msra.mxu0 0.0
    %1675 = vmatprep.subr.mxu0 0.0
    %1676 = vmatpush2.msra.mxu0 0.0
    %1677 = vmatprep.subr.mxu0 0.0
    %1678 = vmatpush2.msra.mxu0 0.0
    %1679 = vmatprep.subr.mxu0 0.0
    %1680 = vmatpush2.msra.mxu0 0.0
    %1681 = vmatprep.subr.mxu0 0.0
    %1682 = vmatpush2.msra.mxu0 0.0
    %1683 = vmatprep.subr.mxu0 0.0
    %1684 = vmatpush2.msra.mxu0 0.0
    %1685 = vmatprep.subr.mxu0 0.0
    %1686 = vmatpush2.msra.mxu0 0.0
    %1687 = vmatprep.subr.mxu0 0.0
    %1688 = vmatpush2.msra.mxu0 0.0
    %1689 = vmatprep.subr.mxu0 0.0
    %1690 = vmatpush2.msra.mxu0 0.0
    %1691 = vmatprep.subr.mxu0 0.0
    %1692 = vmatpush2.msra.mxu0 0.0
    %1693 = vmatprep.subr.mxu0 0.0
    %1694 = vmatpush2.msra.mxu0 0.0
    %1695 = vmatprep.subr.mxu0 0.0
    %1696 = vmatpush2.msra.mxu0 0.0
    %1697 = vmatprep.subr.mxu0 0.0
    %1698 = vmatpush2.msra.mxu0 0.0
    %1699 = vmatprep.subr.mxu0 0.0
    %1700 = vmatpush2.msra.mxu0 0.0
    %1701 = vmatprep.subr.mxu0 0.0
    %1702 = vmatpush2.msra.mxu0 0.0
    %1703 = vmatprep.subr.mxu0 0.0
    %1704 = vmatpush2.msra.mxu0 0.0
    %1705 = vmatprep.mubr.f32.mxu0 0.0
    %v1706 = vand.u32 %v1627, 4294901760
    %v1707 = vsub.f32 %v1627, %v1706
    %v1708 = vand.u32 %v1707, 4294901760
    %v1709 = vsub.f32 %v1707, %v1708
    %v1710 = vand.u32 %v1709, 4294901760
    %1711 = vmatmul.mubr.f32.gmra.mxu0 %v1710
    %v1712 = vpop.f32.mrf.mxu0
    %v1713 = vadd.f32 %v1624, %v1712
    %v1714 = vpop.f32.mrf.mxu0
    %1715 = vdwg.mxu0
    %1716 = vmatprep.subr.mxu0 0.0
    %1717 = vmatpush1.msra.mxu0 0.0
    %1718 = vmatprep.subr.mxu0 0.0
    %1719 = vmatpush1.msra.mxu0 0.0
    %1720 = vmatprep.subr.mxu0 0.0
    %1721 = vmatpush1.msra.mxu0 0.0
    %1722 = vmatprep.subr.mxu0 0.0
    %1723 = vmatpush1.msra.mxu0 0.0
    %1724 = vmatprep.subr.mxu0 0.0
    %v1725 = vand.u32 %v1619, 4294901760
    %v1726 = vsub.f32 %v1619, %v1725
    %v1727 = vand.u32 %v1726, 4294901760
    %v1728 = vsub.f32 %v1726, %v1727
    %v1729 = vand.u32 %v1728, 4294901760
    %1730 = vmatpush1.msra.mxu0 %v1729
    %1731 = vmatprep.subr.mxu0 0.0
    %v1732 = vand.u32 %v1618, 4294901760
    %v1733 = vsub.f32 %v1618, %v1732
    %v1734 = vand.u32 %v1733, 4294901760
    %v1735 = vsub.f32 %v1733, %v1734
    %v1736 = vand.u32 %v1735, 4294901760
    %1737 = vmatpush1.msra.mxu0 %v1736
    %1738 = vmatprep.subr.mxu0 0.0
    %v1739 = vand.u32 %v1617, 4294901760
    %v1740 = vsub.f32 %v1617, %v1739
    %v1741 = vand.u32 %v1740, 4294901760
    %v1742 = vsub.f32 %v1740, %v1741
    %v1743 = vand.u32 %v1742, 4294901760
    %1744 = vmatpush1.msra.mxu0 %v1743
    %1745 = vmatprep.subr.mxu0 0.0
    %v1746 = vand.u32 %v1616, 4294901760
    %v1747 = vsub.f32 %v1616, %v1746
    %v1748 = vand.u32 %v1747, 4294901760
    %v1749 = vsub.f32 %v1747, %v1748
    %v1750 = vand.u32 %v1749, 4294901760
    %1751 = vmatpush1.msra.mxu0 %v1750
    %1752 = vmatprep.subr.mxu0 0.0
    %v1753 = vand.u32 %v1615, 4294901760
    %v1754 = vsub.f32 %v1615, %v1753
    %v1755 = vand.u32 %v1754, 4294901760
    %v1756 = vsub.f32 %v1754, %v1755
    %v1757 = vand.u32 %v1756, 4294901760
    %1758 = vmatpush1.msra.mxu0 %v1757
    %1759 = vmatprep.subr.mxu0 0.0
    %v1760 = vand.u32 %v1614, 4294901760
    %v1761 = vsub.f32 %v1614, %v1760
    %v1762 = vand.u32 %v1761, 4294901760
    %v1763 = vsub.f32 %v1761, %v1762
    %v1764 = vand.u32 %v1763, 4294901760
    %1765 = vmatpush1.msra.mxu0 %v1764
    %1766 = vmatprep.subr.mxu0 0.0
    %v1767 = vand.u32 %v1613, 4294901760
    %v1768 = vsub.f32 %v1613, %v1767
    %v1769 = vand.u32 %v1768, 4294901760
    %v1770 = vsub.f32 %v1768, %v1769
    %v1771 = vand.u32 %v1770, 4294901760
    %1772 = vmatpush1.msra.mxu0 %v1771
    %1773 = vmatprep.subr.mxu0 0.0
    %v1774 = vand.u32 %v1612, 4294901760
    %v1775 = vsub.f32 %v1612, %v1774
    %v1776 = vand.u32 %v1775, 4294901760
    %v1777 = vsub.f32 %v1775, %v1776
    %v1778 = vand.u32 %v1777, 4294901760
    %1779 = vmatpush1.msra.mxu0 %v1778
    %1780 = vmatprep.subr.mxu0 0.0
    %v1781 = vand.u32 %v1611, 4294901760
    %v1782 = vsub.f32 %v1611, %v1781
    %v1783 = vand.u32 %v1782, 4294901760
    %v1784 = vsub.f32 %v1782, %v1783
    %v1785 = vand.u32 %v1784, 4294901760
    %1786 = vmatpush1.msra.mxu0 %v1785
    %1787 = vmatprep.subr.mxu0 0.0
    %v1788 = vand.u32 %v1610, 4294901760
    %v1789 = vsub.f32 %v1610, %v1788
    %v1790 = vand.u32 %v1789, 4294901760
    %v1791 = vsub.f32 %v1789, %v1790
    %v1792 = vand.u32 %v1791, 4294901760
    %1793 = vmatpush1.msra.mxu0 %v1792
    %1794 = vmatprep.subr.mxu0 0.0
    %v1795 = vand.u32 %v1609, 4294901760
    %v1796 = vsub.f32 %v1609, %v1795
    %v1797 = vand.u32 %v1796, 4294901760
    %v1798 = vsub.f32 %v1796, %v1797
    %v1799 = vand.u32 %v1798, 4294901760
    %1800 = vmatpush1.msra.mxu0 %v1799
    %1801 = vmatprep.subr.mxu0 0.0
    %v1802 = vand.u32 %v1608, 4294901760
    %v1803 = vsub.f32 %v1608, %v1802
    %v1804 = vand.u32 %v1803, 4294901760
    %v1805 = vsub.f32 %v1803, %v1804
    %v1806 = vand.u32 %v1805, 4294901760
    %1807 = vmatpush1.msra.mxu0 %v1806
    %1808 = vmatprep.subr.mxu0 0.0
    %1809 = vmatpush2.msra.mxu0 0.0
    %1810 = vmatprep.subr.mxu0 0.0
    %1811 = vmatpush2.msra.mxu0 0.0
    %1812 = vmatprep.subr.mxu0 0.0
    %1813 = vmatpush2.msra.mxu0 0.0
    %1814 = vmatprep.subr.mxu0 0.0
    %1815 = vmatpush2.msra.mxu0 0.0
    %1816 = vmatprep.subr.mxu0 0.0
    %1817 = vmatpush2.msra.mxu0 0.0
    %1818 = vmatprep.subr.mxu0 0.0
    %1819 = vmatpush2.msra.mxu0 0.0
    %1820 = vmatprep.subr.mxu0 0.0
    %1821 = vmatpush2.msra.mxu0 0.0
    %1822 = vmatprep.subr.mxu0 0.0
    %1823 = vmatpush2.msra.mxu0 0.0
    %1824 = vmatprep.subr.mxu0 0.0
    %1825 = vmatpush2.msra.mxu0 0.0
    %1826 = vmatprep.subr.mxu0 0.0
    %1827 = vmatpush2.msra.mxu0 0.0
    %1828 = vmatprep.subr.mxu0 0.0
    %1829 = vmatpush2.msra.mxu0 0.0
    %1830 = vmatprep.subr.mxu0 0.0
    %1831 = vmatpush2.msra.mxu0 0.0
    %1832 = vmatprep.subr.mxu0 0.0
    %1833 = vmatpush2.msra.mxu0 0.0
    %1834 = vmatprep.subr.mxu0 0.0
    %1835 = vmatpush2.msra.mxu0 0.0
    %1836 = vmatprep.subr.mxu0 0.0
    %1837 = vmatpush2.msra.mxu0 0.0
    %1838 = vmatprep.subr.mxu0 0.0
    %1839 = vmatpush2.msra.mxu0 0.0
    %1840 = vmatprep.mubr.f32.mxu0 0.0
    %v1841 = vand.u32 %v1627, 4294901760
    %1842 = vmatmul.mubr.f32.gmra.mxu0 %v1841
    %v1843 = vpop.f32.mrf.mxu0
    %v1844 = vadd.f32 %v1713, %v1843
    %v1845 = vpop.f32.mrf.mxu0
    %1846 = vdwg.mxu0
    %1847 = vmatprep.subr.mxu0 0.0
    %1848 = vmatpush1.msra.mxu0 0.0
    %1849 = vmatprep.subr.mxu0 0.0
    %1850 = vmatpush1.msra.mxu0 0.0
    %1851 = vmatprep.subr.mxu0 0.0
    %1852 = vmatpush1.msra.mxu0 0.0
    %1853 = vmatprep.subr.mxu0 0.0
    %1854 = vmatpush1.msra.mxu0 0.0
    %1855 = vmatprep.subr.mxu0 0.0
    %v1856 = vand.u32 %v1619, 4294901760
    %v1857 = vsub.f32 %v1619, %v1856
    %1858 = vmatpush1.msra.mxu0 %v1857
    %1859 = vmatprep.subr.mxu0 0.0
    %v1860 = vand.u32 %v1618, 4294901760
    %v1861 = vsub.f32 %v1618, %v1860
    %1862 = vmatpush1.msra.mxu0 %v1861
    %1863 = vmatprep.subr.mxu0 0.0
    %v1864 = vand.u32 %v1617, 4294901760
    %v1865 = vsub.f32 %v1617, %v1864
    %1866 = vmatpush1.msra.mxu0 %v1865
    %1867 = vmatprep.subr.mxu0 0.0
    %v1868 = vand.u32 %v1616, 4294901760
    %v1869 = vsub.f32 %v1616, %v1868
    %1870 = vmatpush1.msra.mxu0 %v1869
    %1871 = vmatprep.subr.mxu0 0.0
    %v1872 = vand.u32 %v1615, 4294901760
    %v1873 = vsub.f32 %v1615, %v1872
    %1874 = vmatpush1.msra.mxu0 %v1873
    %1875 = vmatprep.subr.mxu0 0.0
    %v1876 = vand.u32 %v1614, 4294901760
    %v1877 = vsub.f32 %v1614, %v1876
    %1878 = vmatpush1.msra.mxu0 %v1877
    %1879 = vmatprep.subr.mxu0 0.0
    %v1880 = vand.u32 %v1613, 4294901760
    %v1881 = vsub.f32 %v1613, %v1880
    %1882 = vmatpush1.msra.mxu0 %v1881
    %1883 = vmatprep.subr.mxu0 0.0
    %v1884 = vand.u32 %v1612, 4294901760
    %v1885 = vsub.f32 %v1612, %v1884
    %1886 = vmatpush1.msra.mxu0 %v1885
    %1887 = vmatprep.subr.mxu0 0.0
    %v1888 = vand.u32 %v1611, 4294901760
    %v1889 = vsub.f32 %v1611, %v1888
    %1890 = vmatpush1.msra.mxu0 %v1889
    %1891 = vmatprep.subr.mxu0 0.0
    %v1892 = vand.u32 %v1610, 4294901760
    %v1893 = vsub.f32 %v1610, %v1892
    %1894 = vmatpush1.msra.mxu0 %v1893
    %1895 = vmatprep.subr.mxu0 0.0
    %v1896 = vand.u32 %v1609, 4294901760
    %v1897 = vsub.f32 %v1609, %v1896
    %1898 = vmatpush1.msra.mxu0 %v1897
    %1899 = vmatprep.subr.mxu0 0.0
    %v1900 = vand.u32 %v1608, 4294901760
    %v1901 = vsub.f32 %v1608, %v1900
    %1902 = vmatpush1.msra.mxu0 %v1901
    %1903 = vmatprep.subr.mxu0 0.0
    %1904 = vmatpush2.msra.mxu0 0.0
    %1905 = vmatprep.subr.mxu0 0.0
    %1906 = vmatpush2.msra.mxu0 0.0
    %1907 = vmatprep.subr.mxu0 0.0
    %1908 = vmatpush2.msra.mxu0 0.0
    %1909 = vmatprep.subr.mxu0 0.0
    %1910 = vmatpush2.msra.mxu0 0.0
    %1911 = vmatprep.subr.mxu0 0.0
    %1912 = vmatpush2.msra.mxu0 0.0
    %1913 = vmatprep.subr.mxu0 0.0
    %1914 = vmatpush2.msra.mxu0 0.0
    %1915 = vmatprep.subr.mxu0 0.0
    %1916 = vmatpush2.msra.mxu0 0.0
    %1917 = vmatprep.subr.mxu0 0.0
    %1918 = vmatpush2.msra.mxu0 0.0
    %1919 = vmatprep.subr.mxu0 0.0
    %1920 = vmatpush2.msra.mxu0 0.0
    %1921 = vmatprep.subr.mxu0 0.0
    %1922 = vmatpush2.msra.mxu0 0.0
    %1923 = vmatprep.subr.mxu0 0.0
    %1924 = vmatpush2.msra.mxu0 0.0
    %1925 = vmatprep.subr.mxu0 0.0
    %1926 = vmatpush2.msra.mxu0 0.0
    %1927 = vmatprep.subr.mxu0 0.0
    %1928 = vmatpush2.msra.mxu0 0.0
    %1929 = vmatprep.subr.mxu0 0.0
    %1930 = vmatpush2.msra.mxu0 0.0
    %1931 = vmatprep.subr.mxu0 0.0
    %1932 = vmatpush2.msra.mxu0 0.0
    %1933 = vmatprep.subr.mxu0 0.0
    %1934 = vmatpush2.msra.mxu0 0.0
    %1935 = vmatprep.mubr.f32.mxu0 0.0
    %v1936 = vand.u32 %v1627, 4294901760
    %v1937 = vsub.f32 %v1627, %v1936
    %1938 = vmatmul.mubr.f32.gmra.mxu0 %v1937
    %v1939 = vpop.f32.mrf.mxu0
    %v1940 = vadd.f32 %v1844, %v1939
    %v1941 = vpop.f32.mrf.mxu0
    %1942 = vdwg.mxu0
    %1943 = vmatprep.subr.mxu0 0.0
    %1944 = vmatpush1.msra.mxu0 0.0
    %1945 = vmatprep.subr.mxu0 0.0
    %1946 = vmatpush1.msra.mxu0 0.0
    %1947 = vmatprep.subr.mxu0 0.0
    %1948 = vmatpush1.msra.mxu0 0.0
    %1949 = vmatprep.subr.mxu0 0.0
    %1950 = vmatpush1.msra.mxu0 0.0
    %1951 = vmatprep.subr.mxu0 0.0
    %v1952 = vand.u32 %v1619, 4294901760
    %1953 = vmatpush1.msra.mxu0 %v1952
    %1954 = vmatprep.subr.mxu0 0.0
    %v1955 = vand.u32 %v1618, 4294901760
    %1956 = vmatpush1.msra.mxu0 %v1955
    %1957 = vmatprep.subr.mxu0 0.0
    %v1958 = vand.u32 %v1617, 4294901760
    %1959 = vmatpush1.msra.mxu0 %v1958
    %1960 = vmatprep.subr.mxu0 0.0
    %v1961 = vand.u32 %v1616, 4294901760
    %1962 = vmatpush1.msra.mxu0 %v1961
    %1963 = vmatprep.subr.mxu0 0.0
    %v1964 = vand.u32 %v1615, 4294901760
    %1965 = vmatpush1.msra.mxu0 %v1964
    %1966 = vmatprep.subr.mxu0 0.0
    %v1967 = vand.u32 %v1614, 4294901760
    %1968 = vmatpush1.msra.mxu0 %v1967
    %1969 = vmatprep.subr.mxu0 0.0
    %v1970 = vand.u32 %v1613, 4294901760
    %1971 = vmatpush1.msra.mxu0 %v1970
    %1972 = vmatprep.subr.mxu0 0.0
    %v1973 = vand.u32 %v1612, 4294901760
    %1974 = vmatpush1.msra.mxu0 %v1973
    %1975 = vmatprep.subr.mxu0 0.0
    %v1976 = vand.u32 %v1611, 4294901760
    %1977 = vmatpush1.msra.mxu0 %v1976
    %1978 = vmatprep.subr.mxu0 0.0
    %v1979 = vand.u32 %v1610, 4294901760
    %1980 = vmatpush1.msra.mxu0 %v1979
    %1981 = vmatprep.subr.mxu0 0.0
    %v1982 = vand.u32 %v1609, 4294901760
    %1983 = vmatpush1.msra.mxu0 %v1982
    %1984 = vmatprep.subr.mxu0 0.0
    %v1985 = vand.u32 %v1608, 4294901760
    %1986 = vmatpush1.msra.mxu0 %v1985
    %1987 = vmatprep.subr.mxu0 0.0
    %1988 = vmatpush2.msra.mxu0 0.0
    %1989 = vmatprep.subr.mxu0 0.0
    %1990 = vmatpush2.msra.mxu0 0.0
    %1991 = vmatprep.subr.mxu0 0.0
    %1992 = vmatpush2.msra.mxu0 0.0
    %1993 = vmatprep.subr.mxu0 0.0
    %1994 = vmatpush2.msra.mxu0 0.0
    %1995 = vmatprep.subr.mxu0 0.0
    %1996 = vmatpush2.msra.mxu0 0.0
    %1997 = vmatprep.subr.mxu0 0.0
    %1998 = vmatpush2.msra.mxu0 0.0
    %1999 = vmatprep.subr.mxu0 0.0
    %2000 = vmatpush2.msra.mxu0 0.0
    %2001 = vmatprep.subr.mxu0 0.0
    %2002 = vmatpush2.msra.mxu0 0.0
    %2003 = vmatprep.subr.mxu0 0.0
    %2004 = vmatpush2.msra.mxu0 0.0
    %2005 = vmatprep.subr.mxu0 0.0
    %2006 = vmatpush2.msra.mxu0 0.0
    %2007 = vmatprep.subr.mxu0 0.0
    %2008 = vmatpush2.msra.mxu0 0.0
    %2009 = vmatprep.subr.mxu0 0.0
    %2010 = vmatpush2.msra.mxu0 0.0
    %2011 = vmatprep.subr.mxu0 0.0
    %2012 = vmatpush2.msra.mxu0 0.0
    %2013 = vmatprep.subr.mxu0 0.0
    %2014 = vmatpush2.msra.mxu0 0.0
    %2015 = vmatprep.subr.mxu0 0.0
    %2016 = vmatpush2.msra.mxu0 0.0
    %2017 = vmatprep.subr.mxu0 0.0
    %2018 = vmatpush2.msra.mxu0 0.0
    %2019 = vmatprep.mubr.f32.mxu0 0.0
    %v2020 = vand.u32 %v1627, 4294901760
    %v2021 = vsub.f32 %v1627, %v2020
    %v2022 = vand.u32 %v2021, 4294901760
    %2023 = vmatmul.mubr.f32.gmra.mxu0 %v2022
    %v2024 = vpop.f32.mrf.mxu0
    %v2025 = vadd.f32 %v1940, %v2024
    %v2026 = vpop.f32.mrf.mxu0
    %2027 = vdwg.mxu0
    %2028 = vmatprep.subr.mxu0 0.0
    %2029 = vmatpush1.msra.mxu0 0.0
    %2030 = vmatprep.subr.mxu0 0.0
    %2031 = vmatpush1.msra.mxu0 0.0
    %2032 = vmatprep.subr.mxu0 0.0
    %2033 = vmatpush1.msra.mxu0 0.0
    %2034 = vmatprep.subr.mxu0 0.0
    %2035 = vmatpush1.msra.mxu0 0.0
    %2036 = vmatprep.subr.mxu0 0.0
    %v2037 = vand.u32 %v1619, 4294901760
    %v2038 = vsub.f32 %v1619, %v2037
    %v2039 = vand.u32 %v2038, 4294901760
    %2040 = vmatpush1.msra.mxu0 %v2039
    %2041 = vmatprep.subr.mxu0 0.0
    %v2042 = vand.u32 %v1618, 4294901760
    %v2043 = vsub.f32 %v1618, %v2042
    %v2044 = vand.u32 %v2043, 4294901760
    %2045 = vmatpush1.msra.mxu0 %v2044
    %2046 = vmatprep.subr.mxu0 0.0
    %v2047 = vand.u32 %v1617, 4294901760
    %v2048 = vsub.f32 %v1617, %v2047
    %v2049 = vand.u32 %v2048, 4294901760
    %2050 = vmatpush1.msra.mxu0 %v2049
    %2051 = vmatprep.subr.mxu0 0.0
    %v2052 = vand.u32 %v1616, 4294901760
    %v2053 = vsub.f32 %v1616, %v2052
    %v2054 = vand.u32 %v2053, 4294901760
    %2055 = vmatpush1.msra.mxu0 %v2054
    %2056 = vmatprep.subr.mxu0 0.0
    %v2057 = vand.u32 %v1615, 4294901760
    %v2058 = vsub.f32 %v1615, %v2057
    %v2059 = vand.u32 %v2058, 4294901760
    %2060 = vmatpush1.msra.mxu0 %v2059
    %2061 = vmatprep.subr.mxu0 0.0
    %v2062 = vand.u32 %v1614, 4294901760
    %v2063 = vsub.f32 %v1614, %v2062
    %v2064 = vand.u32 %v2063, 4294901760
    %2065 = vmatpush1.msra.mxu0 %v2064
    %2066 = vmatprep.subr.mxu0 0.0
    %v2067 = vand.u32 %v1613, 4294901760
    %v2068 = vsub.f32 %v1613, %v2067
    %v2069 = vand.u32 %v2068, 4294901760
    %2070 = vmatpush1.msra.mxu0 %v2069
    %2071 = vmatprep.subr.mxu0 0.0
    %v2072 = vand.u32 %v1612, 4294901760
    %v2073 = vsub.f32 %v1612, %v2072
    %v2074 = vand.u32 %v2073, 4294901760
    %2075 = vmatpush1.msra.mxu0 %v2074
    %2076 = vmatprep.subr.mxu0 0.0
    %v2077 = vand.u32 %v1611, 4294901760
    %v2078 = vsub.f32 %v1611, %v2077
    %v2079 = vand.u32 %v2078, 4294901760
    %2080 = vmatpush1.msra.mxu0 %v2079
    %2081 = vmatprep.subr.mxu0 0.0
    %v2082 = vand.u32 %v1610, 4294901760
    %v2083 = vsub.f32 %v1610, %v2082
    %v2084 = vand.u32 %v2083, 4294901760
    %2085 = vmatpush1.msra.mxu0 %v2084
    %2086 = vmatprep.subr.mxu0 0.0
    %v2087 = vand.u32 %v1609, 4294901760
    %v2088 = vsub.f32 %v1609, %v2087
    %v2089 = vand.u32 %v2088, 4294901760
    %2090 = vmatpush1.msra.mxu0 %v2089
    %2091 = vmatprep.subr.mxu0 0.0
    %v2092 = vand.u32 %v1608, 4294901760
    %v2093 = vsub.f32 %v1608, %v2092
    %v2094 = vand.u32 %v2093, 4294901760
    %2095 = vmatpush1.msra.mxu0 %v2094
    %2096 = vmatprep.subr.mxu0 0.0
    %2097 = vmatpush2.msra.mxu0 0.0
    %2098 = vmatprep.subr.mxu0 0.0
    %2099 = vmatpush2.msra.mxu0 0.0
    %2100 = vmatprep.subr.mxu0 0.0
    %2101 = vmatpush2.msra.mxu0 0.0
    %2102 = vmatprep.subr.mxu0 0.0
    %2103 = vmatpush2.msra.mxu0 0.0
    %2104 = vmatprep.subr.mxu0 0.0
    %2105 = vmatpush2.msra.mxu0 0.0
    %2106 = vmatprep.subr.mxu0 0.0
    %2107 = vmatpush2.msra.mxu0 0.0
    %2108 = vmatprep.subr.mxu0 0.0
    %2109 = vmatpush2.msra.mxu0 0.0
    %2110 = vmatprep.subr.mxu0 0.0
    %2111 = vmatpush2.msra.mxu0 0.0
    %2112 = vmatprep.subr.mxu0 0.0
    %2113 = vmatpush2.msra.mxu0 0.0
    %2114 = vmatprep.subr.mxu0 0.0
    %2115 = vmatpush2.msra.mxu0 0.0
    %2116 = vmatprep.subr.mxu0 0.0
    %2117 = vmatpush2.msra.mxu0 0.0
    %2118 = vmatprep.subr.mxu0 0.0
    %2119 = vmatpush2.msra.mxu0 0.0
    %2120 = vmatprep.subr.mxu0 0.0
    %2121 = vmatpush2.msra.mxu0 0.0
    %2122 = vmatprep.subr.mxu0 0.0
    %2123 = vmatpush2.msra.mxu0 0.0
    %2124 = vmatprep.subr.mxu0 0.0
    %2125 = vmatpush2.msra.mxu0 0.0
    %2126 = vmatprep.subr.mxu0 0.0
    %2127 = vmatpush2.msra.mxu0 0.0
    %2128 = vmatprep.mubr.f32.mxu0 0.0
    %v2129 = vand.u32 %v1627, 4294901760
    %2130 = vmatmul.mubr.f32.gmra.mxu0 %v2129
    %v2131 = vpop.f32.mrf.mxu0
    %v2132 = vadd.f32 %v2025, %v2131
    %v2133 = vpop.f32.mrf.mxu0
    %2134 = vdwg.mxu0
    %2135 = vmatprep.subr.mxu0 0.0
    %2136 = vmatpush1.msra.mxu0 0.0
    %2137 = vmatprep.subr.mxu0 0.0
    %2138 = vmatpush1.msra.mxu0 0.0
    %2139 = vmatprep.subr.mxu0 0.0
    %2140 = vmatpush1.msra.mxu0 0.0
    %2141 = vmatprep.subr.mxu0 0.0
    %2142 = vmatpush1.msra.mxu0 0.0
    %2143 = vmatprep.subr.mxu0 0.0
    %v2144 = vand.u32 %v1619, 4294901760
    %2145 = vmatpush1.msra.mxu0 %v2144
    %2146 = vmatprep.subr.mxu0 0.0
    %v2147 = vand.u32 %v1618, 4294901760
    %2148 = vmatpush1.msra.mxu0 %v2147
    %2149 = vmatprep.subr.mxu0 0.0
    %v2150 = vand.u32 %v1617, 4294901760
    %2151 = vmatpush1.msra.mxu0 %v2150
    %2152 = vmatprep.subr.mxu0 0.0
    %v2153 = vand.u32 %v1616, 4294901760
    %2154 = vmatpush1.msra.mxu0 %v2153
    %2155 = vmatprep.subr.mxu0 0.0
    %v2156 = vand.u32 %v1615, 4294901760
    %2157 = vmatpush1.msra.mxu0 %v2156
    %2158 = vmatprep.subr.mxu0 0.0
    %v2159 = vand.u32 %v1614, 4294901760
    %2160 = vmatpush1.msra.mxu0 %v2159
    %2161 = vmatprep.subr.mxu0 0.0
    %v2162 = vand.u32 %v1613, 4294901760
    %2163 = vmatpush1.msra.mxu0 %v2162
    %2164 = vmatprep.subr.mxu0 0.0
    %v2165 = vand.u32 %v1612, 4294901760
    %2166 = vmatpush1.msra.mxu0 %v2165
    %2167 = vmatprep.subr.mxu0 0.0
    %v2168 = vand.u32 %v1611, 4294901760
    %2169 = vmatpush1.msra.mxu0 %v2168
    %2170 = vmatprep.subr.mxu0 0.0
    %v2171 = vand.u32 %v1610, 4294901760
    %2172 = vmatpush1.msra.mxu0 %v2171
    %2173 = vmatprep.subr.mxu0 0.0
    %v2174 = vand.u32 %v1609, 4294901760
    %2175 = vmatpush1.msra.mxu0 %v2174
    %2176 = vmatprep.subr.mxu0 0.0
    %v2177 = vand.u32 %v1608, 4294901760
    %2178 = vmatpush1.msra.mxu0 %v2177
    %2179 = vmatprep.subr.mxu0 0.0
    %2180 = vmatpush2.msra.mxu0 0.0
    %2181 = vmatprep.subr.mxu0 0.0
    %2182 = vmatpush2.msra.mxu0 0.0
    %2183 = vmatprep.subr.mxu0 0.0
    %2184 = vmatpush2.msra.mxu0 0.0
    %2185 = vmatprep.subr.mxu0 0.0
    %2186 = vmatpush2.msra.mxu0 0.0
    %2187 = vmatprep.subr.mxu0 0.0
    %2188 = vmatpush2.msra.mxu0 0.0
    %2189 = vmatprep.subr.mxu0 0.0
    %2190 = vmatpush2.msra.mxu0 0.0
    %2191 = vmatprep.subr.mxu0 0.0
    %2192 = vmatpush2.msra.mxu0 0.0
    %2193 = vmatprep.subr.mxu0 0.0
    %2194 = vmatpush2.msra.mxu0 0.0
    %2195 = vmatprep.subr.mxu0 0.0
    %2196 = vmatpush2.msra.mxu0 0.0
    %2197 = vmatprep.subr.mxu0 0.0
    %2198 = vmatpush2.msra.mxu0 0.0
    %2199 = vmatprep.subr.mxu0 0.0
    %2200 = vmatpush2.msra.mxu0 0.0
    %2201 = vmatprep.subr.mxu0 0.0
    %2202 = vmatpush2.msra.mxu0 0.0
    %2203 = vmatprep.subr.mxu0 0.0
    %2204 = vmatpush2.msra.mxu0 0.0
    %2205 = vmatprep.subr.mxu0 0.0
    %2206 = vmatpush2.msra.mxu0 0.0
    %2207 = vmatprep.subr.mxu0 0.0
    %2208 = vmatpush2.msra.mxu0 0.0
    %2209 = vmatprep.subr.mxu0 0.0
    %2210 = vmatpush2.msra.mxu0 0.0
    %2211 = vmatprep.mubr.f32.mxu0 0.0
    %v2212 = vand.u32 %v1627, 4294901760
    %2213 = vmatmul.mubr.f32.gmra.mxu0 %v2212
    %v2214 = vpop.f32.mrf.mxu0
    %v2215 = vadd.f32 %v2132, %v2214
    %v2216 = vpop.f32.mrf.mxu0
    %2217 = vdwg.mxu0
    %vm2218 = vcmask 1041408
    %v2219 = vsel %vm2218, %v2215, -inf
    %v2220 = vrot.slane %v2219, 4
    %v2221 = vmax.f32 %v2219, %v2220
    %v2222 = vrot.slane %v2221, 2
    %v2223 = vmax.f32 %v2221, %v2222
    %v2224 = vrot.slane %v2223, 1
    %v2225 = vmax.f32 %v2223, %v2224
    %v2226 = vsub.f32 %v2215, %v2225
    %v2227 = vmul.f32 %v2226, 1.442695
    %v2228 = vpow.pop %v2227
    %v2229 = vsel %vm2218, %v2228, 0.0
    %v2230 = vrot.slane %v2229, 4
    %v2231 = vadd.f32 %v2229, %v2230
    %v2232 = vrot.slane %v2231, 2
    %v2233 = vadd.f32 %v2231, %v2232
    %v2234 = vrot.slane %v2233, 1
    %v2235 = vadd.f32 %v2233, %v2234
    %v2236 = vrcp.pop %v2235
    %v2237 = vmul.f32 %v2228, %v2236
    %2238 = vst [vmem:[#allocation2] sm:$0x3] %v2237
    // Predicated region
    $region14: #{contextualized_gate.1} parent=1 // pred_check
      _
    $region15: #{contextualized_gate.1} parent=1 // pred_check_branch
      %2240 = sbr.rel (0) target = $region17
    $region16: #{contextualized_gate.1} parent=1 // pred_region
      %s2242 = ssub.s32 32, 32
      %2243 = vsyncadd [#allocation3], %s2242
      %s2245 = sshll.u32 [#allocation2], 4
      %s2246 = int_to_ptr.vmem [resolvable:$true] %s2245
      %2248 = dma.vmem_to_hbm [thread:$0]  %s2246, 32, %s3, [#allocation3]
    $region17: #{contextualized_gate.1} parent=1 // pred_fallthru
      _
    // Predicated region
    $region18: #{contextualized_gate.1} parent=1 // pred_check
      _
    $region19: #{contextualized_gate.1} parent=1 // pred_check_branch
      %2250 = sbr.rel (0) target = $region21
    $region20: #{contextualized_gate.1} parent=1 // pred_region
      %2251 = dma.done [#allocation3], 32
    $region21: #{contextualized_gate.1} parent=1 // pred_fallthru
      _
    %2252 = vsyncpa [#allocation3], 1

</llo_original>
